<compile_context>
chip_gen: v7x
topology: tpu7x:2x2x1
jax: 0.10.0
libtpu: 0.0.40
codegen_flags: <defaults>
</compile_context>

<pallas_src>
from functools import lru_cache

import numpy as np
import jax
import jax.numpy as jnp
from jax.experimental import pallas as pl
from jax.experimental.pallas import tpu as pltpu

# ---- constants matching the torch module ----
SAMPLE_RATE = 16000
N_FFT = 512
WIN_LENGTH = 400
HOP_LENGTH = 160
F_MIN = 20.0
F_MAX = 7600.0
N_MELS = 80
N_MELS_PAD = 128              # lane-dense output slab, sliced back to 80 in wrapper
N_FREQS = N_FFT // 2 + 1      # 257 onesided bins
N_FREQS_T = N_FFT // 2        # 256: Nyquist bin dropped (exact, see assertion)
PREEMPH_COEF = 0.97
FREQ_MASK_WIDTH = (0, 8)
TIME_MASK_WIDTH = (0, 10)
N_CHUNKS = 4                  # N_FFT = 3*HOP + 32 -> 4 hop-sized chunks cover a frame


# ---------------- deterministic parameter setup (glue, plain numpy) ----------------
def _hamming_window_periodic(win_length):
    # torch.hamming_window default: periodic=True, alpha=0.54, beta=0.46
    n = np.arange(win_length)
    return 0.54 - 0.46 * np.cos(2.0 * np.pi * n / win_length)


def _hz_to_mel(f):  # HTK
    return 2595.0 * np.log10(1.0 + f / 700.0)


def _mel_to_hz(m):  # HTK
    return 700.0 * (10.0 ** (m / 2595.0) - 1.0)


@lru_cache(maxsize=None)
def _get_constants():
    # ---- Hamming-windowed DFT as a single matmul weight (Nyquist dropped) ----
    w = _hamming_window_periodic(WIN_LENGTH)
    w_full = np.zeros(N_FFT, dtype=np.float64)
    lpad = (N_FFT - WIN_LENGTH) // 2
    w_full[lpad:lpad + WIN_LENGTH] = w
    n = np.arange(N_FFT)[:, None]
    k = np.arange(N_FREQS_T)[None, :]
    ang = 2.0 * np.pi * n * k / N_FFT
    cosm = w_full[:, None] * np.cos(ang)                    # [512, 256]
    sinm = w_full[:, None] * np.sin(ang)                    # [512, 256]
    dft = np.concatenate([cosm, sinm], axis=1)              # [512, 512]  (re | im)
    # Split into N_CHUNKS hop-sized row blocks (zero-padded tail rows): frame i
    # is covered by waveform chunks i..i+3, so the DFT is emitted directly from
    # overlapped hop-sized waveform slices without materializing frames.
    dft_pad = np.zeros((N_CHUNKS * HOP_LENGTH, 2 * N_FREQS_T), dtype=np.float64)
    dft_pad[:N_FFT] = dft
    dft_split = dft_pad.reshape(N_CHUNKS, HOP_LENGTH, 2 * N_FREQS_T)
    dft_split = jnp.asarray(dft_split.astype(np.float32)).astype(jnp.bfloat16)

    # ---- mel filterbank (torchaudio melscale_fbanks, norm=None, htk) ----
    all_freqs = np.linspace(0, SAMPLE_RATE // 2, N_FREQS)
    m_pts = np.linspace(_hz_to_mel(F_MIN), _hz_to_mel(F_MAX), N_MELS + 2)
    f_pts = _mel_to_hz(m_pts)
    f_diff = f_pts[1:] - f_pts[:-1]
    slopes = f_pts[None, :] - all_freqs[:, None]
    down = -slopes[:, :-2] / f_diff[:-1]
    up = slopes[:, 2:] / f_diff[1:]
    fb = np.maximum(0.0, np.minimum(down, up))              # [257, 80]
    # Dropping the Nyquist frequency row is exact only because F_MAX < sr/2.
    assert np.all(fb[-1] == 0.0), "Nyquist mel row must be all-zero to drop bin 256"
    fb_pad = np.zeros((N_FREQS_T, N_MELS_PAD), dtype=np.float32)
    fb_pad[:, :N_MELS] = fb[:N_FREQS_T]
    melfb = jnp.asarray(fb_pad)                             # [256, 128]
    return dft_split, melfb


# ---------------- Pallas kernel (hot path) ----------------
def fbank_kernel(maskparams_ref,     # SMEM scalar-prefetch [B, 4] int32
                 ypc_ref,            # [1, NF+3, HOP]  f32 padded waveform chunks
                 dft_ref,            # [4, HOP, 2*N_FREQS_T] bf16 windowed DFT
                 melfb_ref,          # [N_FREQS_T, N_MELS_PAD] f32
                 out_ref):           # [1, NF, N_MELS_PAD] f32
    b = pl.program_id(0)
    ypc = ypc_ref[0]                                        # [NF+3, HOP]
    nf = ypc.shape[0] - (N_CHUNKS - 1)

    # Windowed DFT emitted from overlapped hop-sized slices (in-kernel framing):
    # frame i = concat(chunk[i], chunk[i+1], chunk[i+2], chunk[i+3][:32]).
    # bf16 MXU inputs, f32 accumulation.
    acc = jnp.dot(ypc[0:nf].astype(jnp.bfloat16), dft_ref[0],
                  preferred_element_type=jnp.float32)       # [NF, 512]
    for q in range(1, N_CHUNKS):
        acc = acc + jnp.dot(ypc[q:q + nf].astype(jnp.bfloat16), dft_ref[q],
                            preferred_element_type=jnp.float32)
    re = acc[:, :N_FREQS_T]
    im = acc[:, N_FREQS_T:]
    power = re * re + im * im                               # |X|^2  (power=2.0)

    # mel projection (f32) + log + cepstral-mean subtraction over time
    mel = jnp.dot(power, melfb_ref[...], preferred_element_type=jnp.float32)
    logmel = jnp.log(mel + 1e-6)
    logmel = logmel - jnp.mean(logmel, axis=0, keepdims=True)

    # spec-augment: one contiguous time range + one contiguous mel range per item
    tpos = maskparams_ref[b, 0]
    tlen = maskparams_ref[b, 1]
    fpos = maskparams_ref[b, 2]
    flen = maskparams_ref[b, 3]
    t_idx = jax.lax.broadcasted_iota(jnp.int32, (nf, 1), 0)          # [NF, 1]
    f_idx = jax.lax.broadcasted_iota(jnp.int32, (1, N_MELS_PAD), 1)  # [1, 128]
    tmask = (t_idx >= tpos) & (t_idx < tpos + tlen)
    fmask = (f_idx >= fpos) & (f_idx < fpos + flen)
    out_ref[0] = jnp.where(tmask | fmask, 0.0, logmel).astype(out_ref.dtype)


# ---------------- wrapper ----------------
def fbank_aug_forward(x, aug, key):
    """x: [B, T] float32 waveform. Returns [B, N_MELS, 1 + T // HOP_LENGTH]."""
    B, T = x.shape
    nf = 1 + T // HOP_LENGTH

    # PreEmphasis: reflect-pad (1,0) then conv1d([-0.97, 1.0])   (glue)
    padded = jnp.concatenate([x[:, 1:2], x], axis=1)
    y = padded[:, 1:] - PREEMPH_COEF * padded[:, :-1]                 # [B, T]

    # torch.stft center=True reflect padding; then pad/trim so the waveform
    # reshapes into hop-sized chunks covering every frame (framing is in-kernel,
    # so no 3.2x duplicated frames tensor in HBM).
    yp = jnp.pad(y, ((0, 0), (N_FFT // 2, N_FFT // 2)), mode="reflect")
    total = (nf + N_CHUNKS - 1) * HOP_LENGTH
    if total >= yp.shape[1]:
        yp = jnp.pad(yp, ((0, 0), (0, total - yp.shape[1])))
    else:
        yp = yp[:, :total]
    ypc = yp.reshape(B, nf + N_CHUNKS - 1, HOP_LENGTH).astype(jnp.float32)

    dft_split, melfb = _get_constants()

    # random mask parameters (same distribution family as torch.randint)
    # TODO(synk): torch's RNG stream cannot be reproduced bit-exactly; jax.random is
    # used, and the mask-position bound uses the static max width so this stays jit-safe.
    if aug:
        k1, k2, k3, k4 = jax.random.split(key, 4)
        tlen = jax.random.randint(k1, (B,), TIME_MASK_WIDTH[0], TIME_MASK_WIDTH[1])
        tpos = jax.random.randint(k2, (B,), 0, max(1, nf - (TIME_MASK_WIDTH[1] - 1)))
        flen = jax.random.randint(k3, (B,), FREQ_MASK_WIDTH[0], FREQ_MASK_WIDTH[1])
        fpos = jax.random.randint(k4, (B,), 0, max(1, N_MELS - (FREQ_MASK_WIDTH[1] - 1)))
    else:
        tlen = tpos = flen = fpos = jnp.zeros((B,), jnp.int32)
    maskparams = jnp.stack([tpos, tlen, fpos, flen], axis=1).astype(jnp.int32)  # [B, 4]

    out = pl.pallas_call(
        fbank_kernel,
        out_shape=jax.ShapeDtypeStruct((B, nf, N_MELS_PAD), jnp.float32),
        grid_spec=pltpu.PrefetchScalarGridSpec(
            num_scalar_prefetch=1,
            grid=(B,),
            in_specs=[
                pl.BlockSpec((1, nf + N_CHUNKS - 1, HOP_LENGTH),
                             lambda b, mp: (b, 0, 0)),
                pl.BlockSpec((N_CHUNKS, HOP_LENGTH, 2 * N_FREQS_T),
                             lambda b, mp: (0, 0, 0)),
                pl.BlockSpec((N_FREQS_T, N_MELS_PAD),
                             lambda b, mp: (0, 0)),
            ],
            out_specs=pl.BlockSpec((1, nf, N_MELS_PAD), lambda b, mp: (b, 0, 0)),
        ),
        compiler_params=pltpu.CompilerParams(
            dimension_semantics=("parallel",),
            vmem_limit_bytes=64 * 1024 * 1024,
        ),
        # TODO(synk): for very long utterances (NF >> 4096) tile the time axis inside
        # the block with a two-pass CMN to stay within v7x's 64 MiB physical VMEM.
    )(maskparams, ypc, dft_split, melfb)

    # kernel layout is [B, time, mel_pad] -> PyTorch convention [B, n_mels, time]
    return jnp.transpose(out[:, :, :N_MELS], (0, 2, 1))


if __name__ == "__main__":
    key = jax.random.PRNGKey(0)
    kx, kmask = jax.random.split(key)
    B, T = 2, 1600                       # 0.1 s of 16 kHz audio per example
    x = jax.random.normal(kx, (B, T), dtype=jnp.float32)

    fwd = jax.jit(fbank_aug_forward, static_argnames=("aug",))
    out = fwd(x, aug=True, key=kmask)
    out = jax.block_until_ready(out)

    assert out.shape == (B, N_MELS, 1 + T // HOP_LENGTH), out.shape
    assert bool(jnp.all(jnp.isfinite(out)))
    print("KERNEL_OK")
</pallas_src>

<mosaic_0001>
module attributes {stable_mosaic.version = 11 : i64} {
  func.func @fbank_kernel(%arg0: i32, %arg1: memref<2x4xi32, #tpu.memory_space<smem>>, %arg2: memref<1x14x160xf32, #tpu.memory_space<vmem>>, %arg3: memref<4x160x512xbf16, #tpu.memory_space<vmem>>, %arg4: memref<256x128xf32, #tpu.memory_space<vmem>>, %arg5: memref<1x11x128xf32, #tpu.memory_space<vmem>>) attributes {dimension_semantics = [#tpu.dimension_semantics<parallel>], iteration_bounds = array<i64: 2>, scalar_prefetch = 1 : i64, scratch_operands = 0 : i64, tpu.core_type = #tpu.core_type<tc>, window_params = [{transform_indices = @transform_0, window_bounds = array<i64: 1, 14, 160>}, {pipeline_mode = #tpu.pipeline_mode<synchronous>, transform_indices = @transform_1, window_bounds = array<i64: 4, 160, 512>}, {pipeline_mode = #tpu.pipeline_mode<synchronous>, transform_indices = @transform_2, window_bounds = array<i64: 256, 128>}, {transform_indices = @transform_3, window_bounds = array<i64: 1, 11, 128>}]} {
    %c0 = arith.constant 0 : index
    %c0_0 = arith.constant 0 : index
    %c0_1 = arith.constant 0 : index
    %0 = vector.load %arg2[%c0, %c0_0, %c0_1] : memref<1x14x160xf32, #tpu.memory_space<vmem>>, vector<1x14x160xf32>
    %1 = vector.shape_cast %0 : vector<1x14x160xf32> to vector<14x160xf32>
    %2 = vector.extract_strided_slice %1 {offsets = [0, 0], sizes = [11, 160], strides = [1, 1]} : vector<14x160xf32> to vector<11x160xf32>
    %3 = arith.truncf %2 : vector<11x160xf32> to vector<11x160xbf16>
    %c0_2 = arith.constant 0 : index
    %c0_3 = arith.constant 0 : index
    %c0_4 = arith.constant 0 : index
    %4 = vector.load %arg3[%c0_2, %c0_3, %c0_4] : memref<4x160x512xbf16, #tpu.memory_space<vmem>>, vector<1x160x512xbf16>
    %5 = vector.shape_cast %4 : vector<1x160x512xbf16> to vector<160x512xbf16>
    %cst = arith.constant dense<0.000000e+00> : vector<11x512xf32>
    %6 = tpu.matmul %3, %5, %cst {dimension_numbers = #tpu.dot_dimension_numbers<[1], [0], [0], [1], [0, 0, 1, 1], [], []>} : vector<11x160xbf16>, vector<160x512xbf16>, vector<11x512xf32> -> vector<11x512xf32>
    %7 = vector.extract_strided_slice %1 {offsets = [1, 0], sizes = [11, 160], strides = [1, 1]} : vector<14x160xf32> to vector<11x160xf32>
    %8 = arith.truncf %7 : vector<11x160xf32> to vector<11x160xbf16>
    %c1 = arith.constant 1 : index
    %c0_5 = arith.constant 0 : index
    %c0_6 = arith.constant 0 : index
    %9 = vector.load %arg3[%c1, %c0_5, %c0_6] : memref<4x160x512xbf16, #tpu.memory_space<vmem>>, vector<1x160x512xbf16>
    %10 = vector.shape_cast %9 : vector<1x160x512xbf16> to vector<160x512xbf16>
    %cst_7 = arith.constant dense<0.000000e+00> : vector<11x512xf32>
    %11 = tpu.matmul %8, %10, %cst_7 {dimension_numbers = #tpu.dot_dimension_numbers<[1], [0], [0], [1], [0, 0, 1, 1], [], []>} : vector<11x160xbf16>, vector<160x512xbf16>, vector<11x512xf32> -> vector<11x512xf32>
    %12 = arith.addf %6, %11 : vector<11x512xf32>
    %13 = vector.extract_strided_slice %1 {offsets = [2, 0], sizes = [11, 160], strides = [1, 1]} : vector<14x160xf32> to vector<11x160xf32>
    %14 = arith.truncf %13 : vector<11x160xf32> to vector<11x160xbf16>
    %c2 = arith.constant 2 : index
    %c0_8 = arith.constant 0 : index
    %c0_9 = arith.constant 0 : index
    %15 = vector.load %arg3[%c2, %c0_8, %c0_9] : memref<4x160x512xbf16, #tpu.memory_space<vmem>>, vector<1x160x512xbf16>
    %16 = vector.shape_cast %15 : vector<1x160x512xbf16> to vector<160x512xbf16>
    %cst_10 = arith.constant dense<0.000000e+00> : vector<11x512xf32>
    %17 = tpu.matmul %14, %16, %cst_10 {dimension_numbers = #tpu.dot_dimension_numbers<[1], [0], [0], [1], [0, 0, 1, 1], [], []>} : vector<11x160xbf16>, vector<160x512xbf16>, vector<11x512xf32> -> vector<11x512xf32>
    %18 = arith.addf %12, %17 : vector<11x512xf32>
    %19 = vector.extract_strided_slice %1 {offsets = [3, 0], sizes = [11, 160], strides = [1, 1]} : vector<14x160xf32> to vector<11x160xf32>
    %20 = arith.truncf %19 : vector<11x160xf32> to vector<11x160xbf16>
    %c3 = arith.constant 3 : index
    %c0_11 = arith.constant 0 : index
    %c0_12 = arith.constant 0 : index
    %21 = vector.load %arg3[%c3, %c0_11, %c0_12] : memref<4x160x512xbf16, #tpu.memory_space<vmem>>, vector<1x160x512xbf16>
    %22 = vector.shape_cast %21 : vector<1x160x512xbf16> to vector<160x512xbf16>
    %cst_13 = arith.constant dense<0.000000e+00> : vector<11x512xf32>
    %23 = tpu.matmul %20, %22, %cst_13 {dimension_numbers = #tpu.dot_dimension_numbers<[1], [0], [0], [1], [0, 0, 1, 1], [], []>} : vector<11x160xbf16>, vector<160x512xbf16>, vector<11x512xf32> -> vector<11x512xf32>
    %24 = arith.addf %18, %23 : vector<11x512xf32>
    %25 = vector.extract_strided_slice %24 {offsets = [0, 0], sizes = [11, 256], strides = [1, 1]} : vector<11x512xf32> to vector<11x256xf32>
    %26 = vector.extract_strided_slice %24 {offsets = [0, 256], sizes = [11, 256], strides = [1, 1]} : vector<11x512xf32> to vector<11x256xf32>
    %27 = arith.mulf %25, %25 : vector<11x256xf32>
    %28 = arith.mulf %26, %26 : vector<11x256xf32>
    %29 = arith.addf %27, %28 : vector<11x256xf32>
    %c0_14 = arith.constant 0 : index
    %c0_15 = arith.constant 0 : index
    %30 = vector.load %arg4[%c0_14, %c0_15] : memref<256x128xf32, #tpu.memory_space<vmem>>, vector<256x128xf32>
    %cst_16 = arith.constant dense<0.000000e+00> : vector<11x128xf32>
    %31 = tpu.matmul %29, %30, %cst_16 {dimension_numbers = #tpu.dot_dimension_numbers<[1], [0], [0], [1], [0, 0, 1, 1], [], []>} : vector<11x256xf32>, vector<256x128xf32>, vector<11x128xf32> -> vector<11x128xf32>
    %cst_17 = arith.constant 9.99999997E-7 : f32
    %32 = vector.broadcast %cst_17 : f32 to vector<11x128xf32>
    %33 = arith.addf %31, %32 : vector<11x128xf32>
    %34 = math.log %33 : vector<11x128xf32>
    %cst_18 = arith.constant dense<0.000000e+00> : vector<128xf32>
    %35 = vector.multi_reduction <add>, %34, %cst_18 [0] : vector<11x128xf32> to vector<128xf32>
    %36 = vector.shape_cast %35 : vector<128xf32> to vector<1x128xf32>
    %cst_19 = arith.constant 1.100000e+01 : f32
    %37 = vector.broadcast %cst_19 : f32 to vector<1x128xf32>
    %38 = arith.divf %36, %37 : vector<1x128xf32>
    %39 = vector.broadcast %38 : vector<1x128xf32> to vector<11x128xf32>
    %40 = arith.subf %34, %39 : vector<11x128xf32>
    %41 = arith.index_cast %arg0 : i32 to index
    %c0_20 = arith.constant 0 : index
    %42 = memref.load %arg1[%41, %c0_20] : memref<2x4xi32, #tpu.memory_space<smem>>
    %43 = arith.index_cast %arg0 : i32 to index
    %c1_21 = arith.constant 1 : index
    %44 = memref.load %arg1[%43, %c1_21] : memref<2x4xi32, #tpu.memory_space<smem>>
    %45 = arith.index_cast %arg0 : i32 to index
    %c2_22 = arith.constant 2 : index
    %46 = memref.load %arg1[%45, %c2_22] : memref<2x4xi32, #tpu.memory_space<smem>>
    %47 = arith.index_cast %arg0 : i32 to index
    %c3_23 = arith.constant 3 : index
    %48 = memref.load %arg1[%47, %c3_23] : memref<2x4xi32, #tpu.memory_space<smem>>
    %49 = tpu.iota {dimensions = array<i32: 0>} : vector<11x1xi32>
    %50 = tpu.iota {dimensions = array<i32: 1>} : vector<1x128xi32>
    %51 = vector.broadcast %42 : i32 to vector<11x1xi32>
    %52 = arith.cmpi sge, %49, %51 : vector<11x1xi32>
    %53 = arith.addi %42, %44 : i32
    %54 = vector.broadcast %53 : i32 to vector<11x1xi32>
    %55 = arith.cmpi slt, %49, %54 : vector<11x1xi32>
    %56 = arith.andi %52, %55 : vector<11x1xi1>
    %57 = vector.broadcast %46 : i32 to vector<1x128xi32>
    %58 = arith.cmpi sge, %50, %57 : vector<1x128xi32>
    %59 = arith.addi %46, %48 : i32
    %60 = vector.broadcast %59 : i32 to vector<1x128xi32>
    %61 = arith.cmpi slt, %50, %60 : vector<1x128xi32>
    %62 = arith.andi %58, %61 : vector<1x128xi1>
    %63 = vector.broadcast %56 : vector<11x1xi1> to vector<11x128xi1>
    %64 = vector.broadcast %62 : vector<1x128xi1> to vector<11x128xi1>
    %65 = arith.ori %63, %64 : vector<11x128xi1>
    %cst_24 = arith.constant 0.000000e+00 : f32
    %66 = vector.broadcast %cst_24 : f32 to vector<11x128xf32>
    %67 = arith.select %65, %66, %40 : vector<11x128xi1>, vector<11x128xf32>
    %c0_25 = arith.constant 0 : index
    %c0_26 = arith.constant 0 : index
    %c0_27 = arith.constant 0 : index
    %68 = vector.load %arg5[%c0_25, %c0_26, %c0_27] : memref<1x11x128xf32, #tpu.memory_space<vmem>>, vector<1x11x128xf32>
    %69 = vector.shape_cast %68 : vector<1x11x128xf32> to vector<11x128xf32>
    %70 = vector.shape_cast %67 : vector<11x128xf32> to vector<1x11x128xf32>
    tpu.vector_store %arg5[%c0_25, %c0_26, %c0_27], %70 {strides = array<i32>} : memref<1x11x128xf32, #tpu.memory_space<vmem>>, vector<1x11x128xf32>,
    return
  }
  func.func @transform_0(%arg0: i32, %arg1: memref<2x4xi32, #tpu.memory_space<smem>>) -> (i32, i32, i32) {
    %c0_i32 = arith.constant 0 : i32
    %c0_i32_0 = arith.constant 0 : i32
    %c0_i32_1 = arith.constant 0 : i32
    return %arg0, %c0_i32, %c0_i32_0 : i32, i32, i32
  }
  func.func @transform_1(%arg0: i32, %arg1: memref<2x4xi32, #tpu.memory_space<smem>>) -> (i32, i32, i32) {
    %c0_i32 = arith.constant 0 : i32
    %c0_i32_0 = arith.constant 0 : i32
    %c0_i32_1 = arith.constant 0 : i32
    %c0_i32_2 = arith.constant 0 : i32
    return %c0_i32, %c0_i32_0, %c0_i32_1 : i32, i32, i32
  }
  func.func @transform_2(%arg0: i32, %arg1: memref<2x4xi32, #tpu.memory_space<smem>>) -> (i32, i32) {
    %c0_i32 = arith.constant 0 : i32
    %c0_i32_0 = arith.constant 0 : i32
    %c0_i32_1 = arith.constant 0 : i32
    return %c0_i32, %c0_i32_0 : i32, i32
  }
  func.func @transform_3(%arg0: i32, %arg1: memref<2x4xi32, #tpu.memory_space<smem>>) -> (i32, i32, i32) {
    %c0_i32 = arith.constant 0 : i32
    %c0_i32_0 = arith.constant 0 : i32
    %c0_i32_1 = arith.constant 0 : i32
    return %arg0, %c0_i32, %c0_i32_0 : i32, i32, i32
  }
}

</mosaic_0001>

<llo_original>
// kernel: fbank_aug_forward.3
$region0: #{fbank_aug_forward.3}
  #allocation0 [shape = 'u32[]', space=smem, size = 0x4, offset = 0x4, fixed_abs, tag = 'smem constant byte address 0x4 - core index']
  #allocation1 [shape = 'u32[144,128]{1,0:T(1,128)}', space=vmem, size = 0x12000, scoped, tag = 'internal scratch']
  #allocation2 [shape = 's32[1]{0}', space=sflag, size = 0x4, scoped, tag = 'scoped memory for fbank_aug_forward.3']
  #allocation3 [shape = 'u8[1024]{0}', space=smem, size = 0x400, scoped, tag = 'prefetched SMEM operand 0']
  %s0 = inlined_call_operand.hbm [shape: s32[2,4], index: 0, kind: input, shape index: {}]
  %s1 = inlined_call_operand.hbm [shape: f32[2,14,160], index: 1, kind: input, shape index: {}]
  %s2 = inlined_call_operand.hbm [shape: bf16[4,160,512], index: 2, kind: input, shape index: {}]
  %s3 = inlined_call_operand.hbm [shape: f32[256,128], index: 3, kind: input, shape index: {}]
  %s4 = inlined_call_operand.hbm [shape: f32[2,11,128], index: 4, kind: output, shape index: {}]
  %s5 = sld [smem:[#allocation0]]
  $region57: #{fbank_aug_forward.3} parent=0
    _
  %s7 = ssub.s32 1, %s5
  %s8 = scalar_select 0, %s7, %s5
  %10 = dma.hbm_to_smem %s0, 32, [#allocation3], [#allocation2]
  %11 = dma.done [#allocation2], 32
  %12 = sfence
  $region1: #{fbank_aug_forward.3} parent=0
    #allocation4 [shape = 'u8[32768]{0}', space=vmem, size = 0x8000, scoped, tag = 'input window, operand 1']
    #allocation5 [shape = 's32[2]{0}', space=sflag, size = 0x8, scoped, tag = 'scoped memory for fbank_aug_forward.3']
    #allocation6 [shape = 's32[2]{0}', space=sflag, size = 0x8, scoped, tag = 'scoped memory for fbank_aug_forward.3']
    #allocation7 [shape = 'u8[655360]{0}', space=vmem, size = 0xa0000, scoped, tag = 'input window, operand 2, single buffered']
    #allocation8 [shape = 's32[1]{0}', space=sflag, size = 0x4, scoped, tag = 'scoped memory for fbank_aug_forward.3']
    #allocation9 [shape = 'u8[131072]{0}', space=vmem, size = 0x20000, scoped, tag = 'input window, operand 3, single buffered']
    #allocation10 [shape = 'u8[16384]{0}', space=vmem, size = 0x4000, scoped, tag = 'output window, operand 0']
    %13 = vsyncpa [#allocation5], 0
    %s14 = scalar_lea.sflag [#allocation5], 1
    %15 = vsyncpa %s14, 0
    %16 = vsyncpa [#allocation8], 0
    %17 = vsyncpa [#allocation6], 0
    %s18 = scalar_lea.sflag [#allocation6], 1
    %19 = vsyncpa %s18, 0
    loop: start=0, step=1, limit=4
    $region2: #{fbank_aug_forward.3} parent=1 // loop_pre_header
      _
    $region3: #{fbank_aug_forward.3} parent=1 // loop_header
      %s21 = sphi 0, %s25
      %p22 = scmp.ge.s32.totalorder %s21, 4
      %s31 = sphi 0, %s33
      %s34 = sphi 0, %s31
      %s35 = sphi 0, %s34
      %s51 = sphi 0, %s35
      %s55 = sphi 0, %s55
      %s57 = sphi 0, %s55
      %s58 = sphi 0, %s57
      %s72 = sphi 0, %s58
      %s76 = sphi 0, %s76
      %s78 = sphi 0, %s76
      %s79 = sphi 0, %s78
      %s93 = sphi 0, %s79
      %s99 = sphi 0, %s101
      %s102 = sphi 0, %s99
      %s103 = sphi 0, %s102
      %s119 = sphi 0, %s103
    $region4: #{fbank_aug_forward.3} parent=1 // loop_header_branch
      %24 = sbr.rel (%p22) target = $region8
    $region5: #{fbank_aug_forward.3} parent=1 // loop_body
      %s26 = ssub.s32 %s21, 1
      %s27 = ssub.s32 %s21, 2
      %s28 = sadd.s32 %s21, 1
      %s29 = ssub.s32 %s21, %s28
      %p30 = scmp.eq.s32.totalorder %s29, 0
      %s32 = sadd.s32 %s31, 1
      %s33 = scalar_select %p30, %s31, %s32
      %p36 = pneg %p30
      %p37 = scmp.eq.s32.totalorder %s21, 1
      %p38 = por %p36, %p37
      %p39 = scmp.ne.s32.totalorder %s31, %s34
      %p40 = scmp.eq.s32.totalorder %s21, 0
      %p41 = por %p39, %p40
      %p42 = scmp.ne.s32.totalorder %s31, %s34
      %p43 = scmp.eq.s32.totalorder %s26, 1
      %p44 = por %p42, %p43
      %p45 = scmp.ne.s32.totalorder %s34, %s35
      %p46 = scmp.eq.s32.totalorder %s26, 0
      %p47 = por %p45, %p46
      %p48 = scmp.ne.s32.totalorder %s34, %s35
      %p49 = scmp.eq.s32.totalorder %s27, 1
      %p50 = por %p48, %p49
      %p52 = scmp.ne.s32.totalorder %s35, %s51
      %p53 = scmp.eq.s32.totalorder %s27, 0
      %p54 = por %p52, %p53
      %s56 = sadd.s32 %s55, 1
      %p59 = scmp.eq.s32.totalorder %s21, 1
      %p60 = scmp.ne.s32.totalorder %s55, %s57
      %p61 = scmp.eq.s32.totalorder %s21, 0
      %p62 = por %p60, %p61
      %p63 = scmp.ne.s32.totalorder %s55, %s57
      %p64 = scmp.eq.s32.totalorder %s26, 1
      %p65 = por %p63, %p64
      %p66 = scmp.ne.s32.totalorder %s57, %s58
      %p67 = scmp.eq.s32.totalorder %s26, 0
      %p68 = por %p66, %p67
      %p69 = scmp.ne.s32.totalorder %s57, %s58
      %p70 = scmp.eq.s32.totalorder %s27, 1
      %p71 = por %p69, %p70
      %p73 = scmp.ne.s32.totalorder %s58, %s72
      %p74 = scmp.eq.s32.totalorder %s27, 0
      %p75 = por %p73, %p74
      %s77 = sadd.s32 %s76, 1
      %p80 = scmp.eq.s32.totalorder %s21, 1
      %p81 = scmp.ne.s32.totalorder %s76, %s78
      %p82 = scmp.eq.s32.totalorder %s21, 0
      %p83 = por %p81, %p82
      %p84 = scmp.ne.s32.totalorder %s76, %s78
      %p85 = scmp.eq.s32.totalorder %s26, 1
      %p86 = por %p84, %p85
      %p87 = scmp.ne.s32.totalorder %s78, %s79
      %p88 = scmp.eq.s32.totalorder %s26, 0
      %p89 = por %p87, %p88
      %p90 = scmp.ne.s32.totalorder %s78, %s79
      %p91 = scmp.eq.s32.totalorder %s27, 1
      %p92 = por %p90, %p91
      %p94 = scmp.ne.s32.totalorder %s79, %s93
      %p95 = scmp.eq.s32.totalorder %s27, 0
      %p96 = por %p94, %p95
      %s97 = ssub.s32 %s21, %s28
      %p98 = scmp.eq.s32.totalorder %s97, 0
      %s100 = sadd.s32 %s99, 1
      %s101 = scalar_select %p98, %s99, %s100
      %p104 = pneg %p98
      %p105 = scmp.eq.s32.totalorder %s21, 1
      %p106 = por %p104, %p105
      %p107 = scmp.ne.s32.totalorder %s99, %s102
      %p108 = scmp.eq.s32.totalorder %s21, 0
      %p109 = por %p107, %p108
      %p110 = scmp.ne.s32.totalorder %s99, %s102
      %p111 = scmp.eq.s32.totalorder %s26, 1
      %p112 = por %p110, %p111
      %p113 = scmp.ne.s32.totalorder %s102, %s103
      %p114 = scmp.eq.s32.totalorder %s26, 0
      %p115 = por %p113, %p114
      %p116 = scmp.ne.s32.totalorder %s102, %s103
      %p117 = scmp.eq.s32.totalorder %s27, 1
      %p118 = por %p116, %p117
      %p120 = scmp.ne.s32.totalorder %s103, %s119
      %p121 = scmp.eq.s32.totalorder %s27, 0
      %p122 = por %p120, %p121
      %p123 = scmp.le.s32.totalorder 1, %s21
      %p124 = scmp.lt.s32.totalorder %s21, 3
      %p125 = pnand %p123, %p124
      %p126 = pneg %p125
      // Predicated region
      $region9: #{fbank_aug_forward.3} parent=5 // pred_check
        _
      $region10: #{fbank_aug_forward.3} parent=5 // pred_check_branch
        %128 = sbr.rel (%p125) target = $region12
      $region11: #{fbank_aug_forward.3} parent=5 // pred_region
        %s129 = ssub.s32 %s21, 1
        // Predicated region
        $region13: #{fbank_aug_forward.3} parent=11 // pred_check
          %p130 = pneg %p68
        $region14: #{fbank_aug_forward.3} parent=11 // pred_check_branch
          %132 = sbr.rel (%p130) target = $region16
        $region15: #{fbank_aug_forward.3} parent=11 // pred_region
          %s134 = ssub.s32 20480, 20480
          %135 = vsyncadd [#allocation8], %s134
          %s136 = sshll.u32 [#allocation7], 4
          %s137 = int_to_ptr.vmem [resolvable:$true] %s136
          %142 = dma.hbm_to_vmem [thread:$0]  %s2, 20480, %s137, [#allocation8], 256, 256, 16
        $region16: #{fbank_aug_forward.3} parent=11 // pred_fallthru
          _
        // Predicated region
        $region17: #{fbank_aug_forward.3} parent=11 // pred_check
          %p143 = pneg %p89
        $region18: #{fbank_aug_forward.3} parent=11 // pred_check_branch
          %145 = sbr.rel (%p143) target = $region20
        $region19: #{fbank_aug_forward.3} parent=11 // pred_region
          %s147 = ssub.s32 4096, 4096
          %148 = vsyncadd [#allocation8], %s147
          %s149 = sshll.u32 [#allocation9], 4
          %s150 = int_to_ptr.vmem [resolvable:$true] %s149
          %155 = dma.hbm_to_vmem [thread:$0]  %s3, 4096, %s150, [#allocation8], 128, 128, 8
        $region20: #{fbank_aug_forward.3} parent=11 // pred_fallthru
          _
      $region12: #{fbank_aug_forward.3} parent=5 // pred_fallthru
        _
      %p156 = scmp.lt.s32.totalorder %s21, 2
      // Predicated region
      $region21: #{fbank_aug_forward.3} parent=5 // pred_check
        %p157 = pneg %p156
      $region22: #{fbank_aug_forward.3} parent=5 // pred_check_branch
        %159 = sbr.rel (%p157) target = $region24
      $region23: #{fbank_aug_forward.3} parent=5 // pred_region
        // Predicated region
        $region25: #{fbank_aug_forward.3} parent=23 // pred_check
          %p160 = pneg %p41
        $region26: #{fbank_aug_forward.3} parent=23 // pred_check_branch
          %162 = sbr.rel (%p160) target = $region28
        $region27: #{fbank_aug_forward.3} parent=23 // pred_region
          %s163 = sand.u32 %s31, 1
          %s164 = scalar_lea.sflag [#allocation5], %s163
          %s165 = sand.u32 %s31, 1
          %s166 = smul.addr %s165, 32
          %s167 = scalar_lea.vmem [#allocation4], %s166
          %s169 = ssub.s32 512, 512
          %170 = vsyncadd %s164, %s169
          %s171 = smul.addr %s21, 4
          %s172 = smul.addr %s171, 128
          %s173 = scalar_lea.hbm %s1, %s172
          %s174 = sshll.u32 %s167, 4
          %s175 = int_to_ptr.vmem [resolvable:$true] %s174
          %180 = dma.hbm_to_vmem [thread:$0]  %s173, 512, %s175, %s164, 256, 256, 16
        $region28: #{fbank_aug_forward.3} parent=23 // pred_fallthru
          _
      $region24: #{fbank_aug_forward.3} parent=5 // pred_fallthru
        _
      %p181 = scmp.le.s32.totalorder 1, %s21
      %p182 = scmp.lt.s32.totalorder %s21, 3
      %p183 = pnand %p181, %p182
      %p184 = pneg %p183
      // Predicated region
      $region29: #{fbank_aug_forward.3} parent=5 // pred_check
        _
      $region30: #{fbank_aug_forward.3} parent=5 // pred_check_branch
        %186 = sbr.rel (%p183) target = $region32
      $region31: #{fbank_aug_forward.3} parent=5 // pred_region
        %s187 = ssub.s32 %s21, 1
        %s188 = sand.u32 %s34, 1
        %s189 = scalar_lea.sflag [#allocation5], %s188
        %s190 = sand.u32 %s34, 1
        %s191 = smul.addr %s190, 32
        %s192 = scalar_lea.vmem [#allocation4], %s191
        // Predicated region
        $region33: #{fbank_aug_forward.3} parent=31 // pred_check
          %p193 = pneg %p47
        $region34: #{fbank_aug_forward.3} parent=31 // pred_check_branch
          %195 = sbr.rel (%p193) target = $region36
        $region35: #{fbank_aug_forward.3} parent=31 // pred_region
          %196 = dma.done %s189, 512
        $region36: #{fbank_aug_forward.3} parent=31 // pred_fallthru
          _
        // Predicated region
        $region37: #{fbank_aug_forward.3} parent=31 // pred_check
          %p197 = pneg %p68
        $region38: #{fbank_aug_forward.3} parent=31 // pred_check_branch
          %199 = sbr.rel (%p197) target = $region40
        $region39: #{fbank_aug_forward.3} parent=31 // pred_region
          %200 = dma.done [#allocation8], 20480
        $region40: #{fbank_aug_forward.3} parent=31 // pred_fallthru
          _
        // Predicated region
        $region41: #{fbank_aug_forward.3} parent=31 // pred_check
          %p201 = pneg %p89
        $region42: #{fbank_aug_forward.3} parent=31 // pred_check_branch
          %203 = sbr.rel (%p201) target = $region44
        $region43: #{fbank_aug_forward.3} parent=31 // pred_region
          %204 = dma.done [#allocation8], 4096
        $region44: #{fbank_aug_forward.3} parent=31 // pred_fallthru
          _
        %s205 = sand.u32 %s34, 1
        %s206 = scalar_lea.sflag [#allocation5], %s205
        %s207 = sand.u32 %s34, 1
        %s208 = smul.addr %s207, 32
        %s209 = scalar_lea.vmem [#allocation4], %s208
        %p210 = pneg %p47
        %p211 = pneg %p44
        %p212 = pneg %p68
        %p213 = pneg %p65
        %p214 = pneg %p89
        %p215 = pneg %p86
        %p216 = pneg %p115
        %p217 = pneg %p112
        %s218 = sand.u32 %s102, 1
        %s219 = scalar_lea.sflag [#allocation6], %s218
        %s220 = sand.u32 %s102, 1
        %s221 = smul.addr %s220, 16
        %s222 = scalar_lea.vmem [#allocation10], %s221
        %v224 = vld [vmem:[%s192] sm:$0xff]
        %v225 = vld [vmem:[%s192 + $0x8] sm:$0xff]
        %v226 = vld [vmem:[%s192 + $0x10] sm:$0x3f]
        %v227 = vld [vmem:[%s192 + $0x18] sm:$0x3f]
        %v228 = vpack.c.bf16 %v226, %v224
        %v229 = vpack.c.bf16 %v227, %v225
        %v230 = vld [vmem:[#allocation7] sm:$0xff]
        %v231 = vld [vmem:[#allocation7 + $0x8] sm:$0xff]
        %v232 = vld [vmem:[#allocation7 + $0x10] sm:$0xff]
        %v233 = vld [vmem:[#allocation7 + $0x18] sm:$0xff]
        %v234 = vld [vmem:[#allocation7 + $0x20] sm:$0xff]
        %v235 = vld [vmem:[#allocation7 + $0x28] sm:$0xff]
        %v236 = vld [vmem:[#allocation7 + $0x30] sm:$0xff]
        %v237 = vld [vmem:[#allocation7 + $0x38] sm:$0xff]
        %v238 = vld [vmem:[#allocation7 + $0x40] sm:$0xff]
        %v239 = vld [vmem:[#allocation7 + $0x48] sm:$0xff]
        %v240 = vld [vmem:[#allocation7 + $0x50] sm:$0xff]
        %v241 = vld [vmem:[#allocation7 + $0x58] sm:$0xff]
        %v242 = vld [vmem:[#allocation7 + $0x60] sm:$0xff]
        %v243 = vld [vmem:[#allocation7 + $0x68] sm:$0xff]
        %v244 = vld [vmem:[#allocation7 + $0x70] sm:$0xff]
        %v245 = vld [vmem:[#allocation7 + $0x78] sm:$0xff]
        %v246 = vld [vmem:[#allocation7 + $0x80] sm:$0xff]
        %v247 = vld [vmem:[#allocation7 + $0x88] sm:$0xff]
        %v248 = vld [vmem:[#allocation7 + $0x90] sm:$0xff]
        %v249 = vld [vmem:[#allocation7 + $0x98] sm:$0xff]
        %v250 = vld [vmem:[#allocation7 + $0xa0] sm:$0xff]
        %v251 = vld [vmem:[#allocation7 + $0xa8] sm:$0xff]
        %v252 = vld [vmem:[#allocation7 + $0xb0] sm:$0xff]
        %v253 = vld [vmem:[#allocation7 + $0xb8] sm:$0xff]
        %v254 = vld [vmem:[#allocation7 + $0xc0] sm:$0xff]
        %v255 = vld [vmem:[#allocation7 + $0xc8] sm:$0xff]
        %v256 = vld [vmem:[#allocation7 + $0xd0] sm:$0xff]
        %v257 = vld [vmem:[#allocation7 + $0xd8] sm:$0xff]
        %v258 = vld [vmem:[#allocation7 + $0xe0] sm:$0xff]
        %v259 = vld [vmem:[#allocation7 + $0xe8] sm:$0xff]
        %v260 = vld [vmem:[#allocation7 + $0xf0] sm:$0xff]
        %v261 = vld [vmem:[#allocation7 + $0xf8] sm:$0xff]
        %v262 = vld [vmem:[#allocation7 + $0x100] sm:$0xff]
        %v263 = vld [vmem:[#allocation7 + $0x108] sm:$0xff]
        %v264 = vld [vmem:[#allocation7 + $0x110] sm:$0xff]
        %v265 = vld [vmem:[#allocation7 + $0x118] sm:$0xff]
        %v266 = vld [vmem:[#allocation7 + $0x120] sm:$0xff]
        %v267 = vld [vmem:[#allocation7 + $0x128] sm:$0xff]
        %v268 = vld [vmem:[#allocation7 + $0x130] sm:$0xff]
        %v269 = vld [vmem:[#allocation7 + $0x138] sm:$0xff]
        %s270 = scalar_lea.vmem [#allocation7], 320
        %v271 = vld [vmem:[%s270] sm:$0xff]
        %v272 = vld [vmem:[%s270 + $0x8] sm:$0xff]
        %v273 = vld [vmem:[%s270 + $0x10] sm:$0xff]
        %v274 = vld [vmem:[%s270 + $0x18] sm:$0xff]
        %v275 = vld [vmem:[%s270 + $0x20] sm:$0xff]
        %v276 = vld [vmem:[%s270 + $0x28] sm:$0xff]
        %v277 = vld [vmem:[%s270 + $0x30] sm:$0xff]
        %v278 = vld [vmem:[%s270 + $0x38] sm:$0xff]
        %v279 = vld [vmem:[%s270 + $0x40] sm:$0xff]
        %v280 = vld [vmem:[%s270 + $0x48] sm:$0xff]
        %v281 = vld [vmem:[%s270 + $0x50] sm:$0xff]
        %v282 = vld [vmem:[%s270 + $0x58] sm:$0xff]
        %v283 = vld [vmem:[%s270 + $0x60] sm:$0xff]
        %v284 = vld [vmem:[%s270 + $0x68] sm:$0xff]
        %v285 = vld [vmem:[%s270 + $0x70] sm:$0xff]
        %v286 = vld [vmem:[%s270 + $0x78] sm:$0xff]
        %v287 = vld [vmem:[%s270 + $0x80] sm:$0xff]
        %v288 = vld [vmem:[%s270 + $0x88] sm:$0xff]
        %v289 = vld [vmem:[%s270 + $0x90] sm:$0xff]
        %v290 = vld [vmem:[%s270 + $0x98] sm:$0xff]
        %v291 = vld [vmem:[%s270 + $0xa0] sm:$0xff]
        %v292 = vld [vmem:[%s270 + $0xa8] sm:$0xff]
        %v293 = vld [vmem:[%s270 + $0xb0] sm:$0xff]
        %v294 = vld [vmem:[%s270 + $0xb8] sm:$0xff]
        %v295 = vld [vmem:[%s270 + $0xc0] sm:$0xff]
        %v296 = vld [vmem:[%s270 + $0xc8] sm:$0xff]
        %v297 = vld [vmem:[%s270 + $0xd0] sm:$0xff]
        %v298 = vld [vmem:[%s270 + $0xd8] sm:$0xff]
        %v299 = vld [vmem:[%s270 + $0xe0] sm:$0xff]
        %v300 = vld [vmem:[%s270 + $0xe8] sm:$0xff]
        %v301 = vld [vmem:[%s270 + $0xf0] sm:$0xff]
        %v302 = vld [vmem:[%s270 + $0xf8] sm:$0xff]
        %v303 = vld [vmem:[%s270 + $0x100] sm:$0xff]
        %v304 = vld [vmem:[%s270 + $0x108] sm:$0xff]
        %v305 = vld [vmem:[%s270 + $0x110] sm:$0xff]
        %v306 = vld [vmem:[%s270 + $0x118] sm:$0xff]
        %v307 = vld [vmem:[%s270 + $0x120] sm:$0xff]
        %v308 = vld [vmem:[%s270 + $0x128] sm:$0xff]
        %v309 = vld [vmem:[%s270 + $0x130] sm:$0xff]
        %v310 = vld [vmem:[%s270 + $0x138] sm:$0xff]
        %v312 = vshrl.u32 %v228, 16
        %v314 = vshll.u32 %v228, 16
        %v316 = vrot.slane %v314, 1
        %v317 = vor.u32 %v312, %v316
        %v319 = vshrl.u32 %v229, 16
        %v321 = vshll.u32 %v229, 16
        %v323 = vrot.slane %v321, 1
        %v324 = vor.u32 %v319, %v323
        %v366 = vunpack.c.l.b16 %v271
        %v367 = vunpack.c.h.b16 %v271
        %v368 = vunpack.c.l.b16 %v272
        %v369 = vunpack.c.h.b16 %v272
        %v370 = vunpack.c.l.b16 %v273
        %v371 = vunpack.c.h.b16 %v273
        %v372 = vunpack.c.l.b16 %v274
        %v373 = vunpack.c.h.b16 %v274
        %v374 = vunpack.c.l.b16 %v275
        %v375 = vunpack.c.h.b16 %v275
        %v376 = vunpack.c.l.b16 %v276
        %v377 = vunpack.c.h.b16 %v276
        %v378 = vunpack.c.l.b16 %v277
        %v379 = vunpack.c.h.b16 %v277
        %v380 = vunpack.c.l.b16 %v278
        %v381 = vunpack.c.h.b16 %v278
        %v382 = vunpack.c.l.b16 %v279
        %v383 = vunpack.c.h.b16 %v279
        %v384 = vunpack.c.l.b16 %v280
        %v385 = vunpack.c.h.b16 %v280
        %v386 = vunpack.c.l.b16 %v281
        %v387 = vunpack.c.h.b16 %v281
        %v388 = vunpack.c.l.b16 %v282
        %v389 = vunpack.c.h.b16 %v282
        %v390 = vunpack.c.l.b16 %v283
        %v391 = vunpack.c.h.b16 %v283
        %v392 = vunpack.c.l.b16 %v284
        %v393 = vunpack.c.h.b16 %v284
        %v394 = vunpack.c.l.b16 %v285
        %v395 = vunpack.c.h.b16 %v285
        %v396 = vunpack.c.l.b16 %v286
        %v397 = vunpack.c.h.b16 %v286
        %v398 = vunpack.c.l.b16 %v287
        %v399 = vunpack.c.h.b16 %v287
        %v400 = vunpack.c.l.b16 %v288
        %v401 = vunpack.c.h.b16 %v288
        %v402 = vunpack.c.l.b16 %v289
        %v403 = vunpack.c.h.b16 %v289
        %v404 = vunpack.c.l.b16 %v290
        %v405 = vunpack.c.h.b16 %v290
        %v406 = vunpack.c.l.b16 %v291
        %v407 = vunpack.c.h.b16 %v291
        %v408 = vunpack.c.l.b16 %v292
        %v409 = vunpack.c.h.b16 %v292
        %v410 = vunpack.c.l.b16 %v293
        %v411 = vunpack.c.h.b16 %v293
        %v412 = vunpack.c.l.b16 %v294
        %v413 = vunpack.c.h.b16 %v294
        %v414 = vunpack.c.l.b16 %v295
        %v415 = vunpack.c.h.b16 %v295
        %v416 = vunpack.c.l.b16 %v296
        %v417 = vunpack.c.h.b16 %v296
        %v418 = vunpack.c.l.b16 %v297
        %v419 = vunpack.c.h.b16 %v297
        %v420 = vunpack.c.l.b16 %v298
        %v421 = vunpack.c.h.b16 %v298
        %v422 = vunpack.c.l.b16 %v299
        %v423 = vunpack.c.h.b16 %v299
        %v424 = vunpack.c.l.b16 %v300
        %v425 = vunpack.c.h.b16 %v300
        %v426 = vunpack.c.l.b16 %v301
        %v427 = vunpack.c.h.b16 %v301
        %v428 = vunpack.c.l.b16 %v302
        %v429 = vunpack.c.h.b16 %v302
        %v430 = vunpack.c.l.b16 %v303
        %v431 = vunpack.c.h.b16 %v303
        %v432 = vunpack.c.l.b16 %v304
        %v433 = vunpack.c.h.b16 %v304
        %v434 = vunpack.c.l.b16 %v305
        %v435 = vunpack.c.h.b16 %v305
        %v436 = vunpack.c.l.b16 %v306
        %v437 = vunpack.c.h.b16 %v306
        %v438 = vunpack.c.l.b16 %v307
        %v439 = vunpack.c.h.b16 %v307
        %v440 = vunpack.c.l.b16 %v308
        %v441 = vunpack.c.h.b16 %v308
        %v442 = vunpack.c.l.b16 %v309
        %v443 = vunpack.c.h.b16 %v309
        %v444 = vunpack.c.l.b16 %v310
        %v445 = vunpack.c.h.b16 %v310
        %v446 = vpack.c.b16 %v370, %v366
        %v447 = vpack.c.b16 %v371, %v367
        %v448 = vpack.c.b16 %v372, %v368
        %v449 = vpack.c.b16 %v373, %v369
        %v450 = vpack.c.b16 %v378, %v374
        %v451 = vpack.c.b16 %v379, %v375
        %v452 = vpack.c.b16 %v380, %v376
        %v453 = vpack.c.b16 %v381, %v377
        %v454 = vpack.c.b16 %v386, %v382
        %v455 = vpack.c.b16 %v387, %v383
        %v456 = vpack.c.b16 %v388, %v384
        %v457 = vpack.c.b16 %v389, %v385
        %v458 = vpack.c.b16 %v394, %v390
        %v459 = vpack.c.b16 %v395, %v391
        %v460 = vpack.c.b16 %v396, %v392
        %v461 = vpack.c.b16 %v397, %v393
        %v462 = vpack.c.b16 %v402, %v398
        %v463 = vpack.c.b16 %v403, %v399
        %v464 = vpack.c.b16 %v404, %v400
        %v465 = vpack.c.b16 %v405, %v401
        %v466 = vpack.c.b16 %v410, %v406
        %v467 = vpack.c.b16 %v411, %v407
        %v468 = vpack.c.b16 %v412, %v408
        %v469 = vpack.c.b16 %v413, %v409
        %v470 = vpack.c.b16 %v418, %v414
        %v471 = vpack.c.b16 %v419, %v415
        %v472 = vpack.c.b16 %v420, %v416
        %v473 = vpack.c.b16 %v421, %v417
        %v474 = vpack.c.b16 %v426, %v422
        %v475 = vpack.c.b16 %v427, %v423
        %v476 = vpack.c.b16 %v428, %v424
        %v477 = vpack.c.b16 %v429, %v425
        %v478 = vpack.c.b16 %v434, %v430
        %v479 = vpack.c.b16 %v435, %v431
        %v480 = vpack.c.b16 %v436, %v432
        %v481 = vpack.c.b16 %v437, %v433
        %v482 = vpack.c.b16 %v442, %v438
        %v483 = vpack.c.b16 %v443, %v439
        %v484 = vpack.c.b16 %v444, %v440
        %v485 = vpack.c.b16 %v445, %v441
        %vm526 = vcmask 261120
        %v528 = vsel %vm526, %v324, 0
        %530 = vmatprep.subr.bf16.mxu0 %v447
        %531 = vmatpush1.bf16.msra.mxu0 %v446
        %532 = vmatprep.subr.bf16.mxu0 %v451
        %533 = vmatpush1.bf16.msra.mxu0 %v450
        %534 = vmatprep.subr.bf16.mxu0 %v455
        %535 = vmatpush1.bf16.msra.mxu0 %v454
        %536 = vmatprep.subr.bf16.mxu0 %v459
        %537 = vmatpush1.bf16.msra.mxu0 %v458
        %538 = vmatprep.subr.bf16.mxu0 %v463
        %539 = vmatpush1.bf16.msra.mxu0 %v462
        %540 = vmatprep.subr.bf16.mxu0 %v467
        %541 = vmatpush1.bf16.msra.mxu0 %v466
        %542 = vmatprep.subr.bf16.mxu0 %v471
        %543 = vmatpush1.bf16.msra.mxu0 %v470
        %544 = vmatprep.subr.bf16.mxu0 %v475
        %545 = vmatpush1.bf16.msra.mxu0 %v474
        %546 = vmatprep.subr.bf16.mxu0 %v479
        %547 = vmatpush1.bf16.msra.mxu0 %v478
        %548 = vmatprep.subr.bf16.mxu0 %v483
        %549 = vmatpush1.bf16.msra.mxu0 %v482
        %550 = vmatprep.subr.bf16.mxu0 0
        %551 = vmatpush1.bf16.msra.mxu0 0
        %552 = vmatprep.subr.bf16.mxu0 0
        %553 = vmatpush1.bf16.msra.mxu0 0
        %554 = vmatprep.subr.bf16.mxu0 0
        %555 = vmatpush1.bf16.msra.mxu0 0
        %556 = vmatprep.subr.bf16.mxu0 0
        %557 = vmatpush1.bf16.msra.mxu0 0
        %558 = vmatprep.subr.bf16.mxu0 0
        %559 = vmatpush1.bf16.msra.mxu0 0
        %560 = vmatprep.subr.bf16.mxu0 0
        %561 = vmatpush1.bf16.msra.mxu0 0
        %562 = vmatprep.mubr.bf16.mxu0 %v528
        %563 = vmatmul.mubr.bf16.gmra.mrb[0].mxu0 %v317
        %v564 = vpop.f32.mrb[0].mxu0
        %v565 = vadd.f32 0.0, %v564
        %v566 = vpop.f32.mrb[0].mxu0
        %v567 = vadd.f32 0.0, %v566
        %v568 = vpop.f32.mrb[0].mxu0
        %v569 = vadd.f32 0.0, %v568
        %v570 = vpop.f32.mrb[0].mxu0
        %v571 = vadd.f32 0.0, %v570
        %572 = vdwg.mxu0
        %573 = vmatprep.subr.bf16.mxu0 %v449
        %574 = vmatpush1.bf16.msra.mxu0 %v448
        %575 = vmatprep.subr.bf16.mxu0 %v453
        %576 = vmatpush1.bf16.msra.mxu0 %v452
        %577 = vmatprep.subr.bf16.mxu0 %v457
        %578 = vmatpush1.bf16.msra.mxu0 %v456
        %579 = vmatprep.subr.bf16.mxu0 %v461
        %580 = vmatpush1.bf16.msra.mxu0 %v460
        %581 = vmatprep.subr.bf16.mxu0 %v465
        %582 = vmatpush1.bf16.msra.mxu0 %v464
        %583 = vmatprep.subr.bf16.mxu0 %v469
        %584 = vmatpush1.bf16.msra.mxu0 %v468
        %585 = vmatprep.subr.bf16.mxu0 %v473
        %586 = vmatpush1.bf16.msra.mxu0 %v472
        %587 = vmatprep.subr.bf16.mxu0 %v477
        %588 = vmatpush1.bf16.msra.mxu0 %v476
        %589 = vmatprep.subr.bf16.mxu0 %v481
        %590 = vmatpush1.bf16.msra.mxu0 %v480
        %591 = vmatprep.subr.bf16.mxu0 %v485
        %592 = vmatpush1.bf16.msra.mxu0 %v484
        %593 = vmatprep.subr.bf16.mxu0 0
        %594 = vmatpush1.bf16.msra.mxu0 0
        %595 = vmatprep.subr.bf16.mxu0 0
        %596 = vmatpush1.bf16.msra.mxu0 0
        %597 = vmatprep.subr.bf16.mxu0 0
        %598 = vmatpush1.bf16.msra.mxu0 0
        %599 = vmatprep.subr.bf16.mxu0 0
        %600 = vmatpush1.bf16.msra.mxu0 0
        %601 = vmatprep.subr.bf16.mxu0 0
        %602 = vmatpush1.bf16.msra.mxu0 0
        %603 = vmatprep.subr.bf16.mxu0 0
        %604 = vmatpush1.bf16.msra.mxu0 0
        %605 = vmatprep.mubr.bf16.mxu0 %v528
        %606 = vmatmul.mubr.bf16.gmra.mrb[0].mxu0 %v317
        %v607 = vpop.f32.mrb[0].mxu0
        %v608 = vadd.f32 0.0, %v607
        %v609 = vpop.f32.mrb[0].mxu0
        %v610 = vadd.f32 0.0, %v609
        %v611 = vpop.f32.mrb[0].mxu0
        %v612 = vadd.f32 0.0, %v611
        %v613 = vpop.f32.mrb[0].mxu0
        %v614 = vadd.f32 0.0, %v613
        %615 = vdwg.mxu0
        %v656 = vunpack.c.l.b16 %v230
        %v657 = vunpack.c.h.b16 %v230
        %v658 = vunpack.c.l.b16 %v231
        %v659 = vunpack.c.h.b16 %v231
        %v660 = vunpack.c.l.b16 %v232
        %v661 = vunpack.c.h.b16 %v232
        %v662 = vunpack.c.l.b16 %v233
        %v663 = vunpack.c.h.b16 %v233
        %v664 = vunpack.c.l.b16 %v234
        %v665 = vunpack.c.h.b16 %v234
        %v666 = vunpack.c.l.b16 %v235
        %v667 = vunpack.c.h.b16 %v235
        %v668 = vunpack.c.l.b16 %v236
        %v669 = vunpack.c.h.b16 %v236
        %v670 = vunpack.c.l.b16 %v237
        %v671 = vunpack.c.h.b16 %v237
        %v672 = vunpack.c.l.b16 %v238
        %v673 = vunpack.c.h.b16 %v238
        %v674 = vunpack.c.l.b16 %v239
        %v675 = vunpack.c.h.b16 %v239
        %v676 = vunpack.c.l.b16 %v240
        %v677 = vunpack.c.h.b16 %v240
        %v678 = vunpack.c.l.b16 %v241
        %v679 = vunpack.c.h.b16 %v241
        %v680 = vunpack.c.l.b16 %v242
        %v681 = vunpack.c.h.b16 %v242
        %v682 = vunpack.c.l.b16 %v243
        %v683 = vunpack.c.h.b16 %v243
        %v684 = vunpack.c.l.b16 %v244
        %v685 = vunpack.c.h.b16 %v244
        %v686 = vunpack.c.l.b16 %v245
        %v687 = vunpack.c.h.b16 %v245
        %v688 = vunpack.c.l.b16 %v246
        %v689 = vunpack.c.h.b16 %v246
        %v690 = vunpack.c.l.b16 %v247
        %v691 = vunpack.c.h.b16 %v247
        %v692 = vunpack.c.l.b16 %v248
        %v693 = vunpack.c.h.b16 %v248
        %v694 = vunpack.c.l.b16 %v249
        %v695 = vunpack.c.h.b16 %v249
        %v696 = vunpack.c.l.b16 %v250
        %v697 = vunpack.c.h.b16 %v250
        %v698 = vunpack.c.l.b16 %v251
        %v699 = vunpack.c.h.b16 %v251
        %v700 = vunpack.c.l.b16 %v252
        %v701 = vunpack.c.h.b16 %v252
        %v702 = vunpack.c.l.b16 %v253
        %v703 = vunpack.c.h.b16 %v253
        %v704 = vunpack.c.l.b16 %v254
        %v705 = vunpack.c.h.b16 %v254
        %v706 = vunpack.c.l.b16 %v255
        %v707 = vunpack.c.h.b16 %v255
        %v708 = vunpack.c.l.b16 %v256
        %v709 = vunpack.c.h.b16 %v256
        %v710 = vunpack.c.l.b16 %v257
        %v711 = vunpack.c.h.b16 %v257
        %v712 = vunpack.c.l.b16 %v258
        %v713 = vunpack.c.h.b16 %v258
        %v714 = vunpack.c.l.b16 %v259
        %v715 = vunpack.c.h.b16 %v259
        %v716 = vunpack.c.l.b16 %v260
        %v717 = vunpack.c.h.b16 %v260
        %v718 = vunpack.c.l.b16 %v261
        %v719 = vunpack.c.h.b16 %v261
        %v720 = vunpack.c.l.b16 %v262
        %v721 = vunpack.c.h.b16 %v262
        %v722 = vunpack.c.l.b16 %v263
        %v723 = vunpack.c.h.b16 %v263
        %v724 = vunpack.c.l.b16 %v264
        %v725 = vunpack.c.h.b16 %v264
        %v726 = vunpack.c.l.b16 %v265
        %v727 = vunpack.c.h.b16 %v265
        %v728 = vunpack.c.l.b16 %v266
        %v729 = vunpack.c.h.b16 %v266
        %v730 = vunpack.c.l.b16 %v267
        %v731 = vunpack.c.h.b16 %v267
        %v732 = vunpack.c.l.b16 %v268
        %v733 = vunpack.c.h.b16 %v268
        %v734 = vunpack.c.l.b16 %v269
        %v735 = vunpack.c.h.b16 %v269
        %v736 = vpack.c.b16 %v660, %v656
        %v737 = vpack.c.b16 %v661, %v657
        %v738 = vpack.c.b16 %v662, %v658
        %v739 = vpack.c.b16 %v663, %v659
        %v740 = vpack.c.b16 %v668, %v664
        %v741 = vpack.c.b16 %v669, %v665
        %v742 = vpack.c.b16 %v670, %v666
        %v743 = vpack.c.b16 %v671, %v667
        %v744 = vpack.c.b16 %v676, %v672
        %v745 = vpack.c.b16 %v677, %v673
        %v746 = vpack.c.b16 %v678, %v674
        %v747 = vpack.c.b16 %v679, %v675
        %v748 = vpack.c.b16 %v684, %v680
        %v749 = vpack.c.b16 %v685, %v681
        %v750 = vpack.c.b16 %v686, %v682
        %v751 = vpack.c.b16 %v687, %v683
        %v752 = vpack.c.b16 %v692, %v688
        %v753 = vpack.c.b16 %v693, %v689
        %v754 = vpack.c.b16 %v694, %v690
        %v755 = vpack.c.b16 %v695, %v691
        %v756 = vpack.c.b16 %v700, %v696
        %v757 = vpack.c.b16 %v701, %v697
        %v758 = vpack.c.b16 %v702, %v698
        %v759 = vpack.c.b16 %v703, %v699
        %v760 = vpack.c.b16 %v708, %v704
        %v761 = vpack.c.b16 %v709, %v705
        %v762 = vpack.c.b16 %v710, %v706
        %v763 = vpack.c.b16 %v711, %v707
        %v764 = vpack.c.b16 %v716, %v712
        %v765 = vpack.c.b16 %v717, %v713
        %v766 = vpack.c.b16 %v718, %v714
        %v767 = vpack.c.b16 %v719, %v715
        %v768 = vpack.c.b16 %v724, %v720
        %v769 = vpack.c.b16 %v725, %v721
        %v770 = vpack.c.b16 %v726, %v722
        %v771 = vpack.c.b16 %v727, %v723
        %v772 = vpack.c.b16 %v732, %v728
        %v773 = vpack.c.b16 %v733, %v729
        %v774 = vpack.c.b16 %v734, %v730
        %v775 = vpack.c.b16 %v735, %v731
        %v816 = vsel %vm526, %v229, 0
        %818 = vmatprep.subr.bf16.mxu0 %v737
        %819 = vmatpush1.bf16.msra.mxu0 %v736
        %820 = vmatprep.subr.bf16.mxu0 %v741
        %821 = vmatpush1.bf16.msra.mxu0 %v740
        %822 = vmatprep.subr.bf16.mxu0 %v745
        %823 = vmatpush1.bf16.msra.mxu0 %v744
        %824 = vmatprep.subr.bf16.mxu0 %v749
        %825 = vmatpush1.bf16.msra.mxu0 %v748
        %826 = vmatprep.subr.bf16.mxu0 %v753
        %827 = vmatpush1.bf16.msra.mxu0 %v752
        %828 = vmatprep.subr.bf16.mxu0 %v757
        %829 = vmatpush1.bf16.msra.mxu0 %v756
        %830 = vmatprep.subr.bf16.mxu0 %v761
        %831 = vmatpush1.bf16.msra.mxu0 %v760
        %832 = vmatprep.subr.bf16.mxu0 %v765
        %833 = vmatpush1.bf16.msra.mxu0 %v764
        %834 = vmatprep.subr.bf16.mxu0 %v769
        %835 = vmatpush1.bf16.msra.mxu0 %v768
        %836 = vmatprep.subr.bf16.mxu0 %v773
        %837 = vmatpush1.bf16.msra.mxu0 %v772
        %838 = vmatprep.subr.bf16.mxu0 0
        %839 = vmatpush1.bf16.msra.mxu0 0
        %840 = vmatprep.subr.bf16.mxu0 0
        %841 = vmatpush1.bf16.msra.mxu0 0
        %842 = vmatprep.subr.bf16.mxu0 0
        %843 = vmatpush1.bf16.msra.mxu0 0
        %844 = vmatprep.subr.bf16.mxu0 0
        %845 = vmatpush1.bf16.msra.mxu0 0
        %846 = vmatprep.subr.bf16.mxu0 0
        %847 = vmatpush1.bf16.msra.mxu0 0
        %848 = vmatprep.subr.bf16.mxu0 0
        %849 = vmatpush1.bf16.msra.mxu0 0
        %850 = vmatprep.mubr.bf16.mxu0 %v816
        %851 = vmatmul.mubr.bf16.gmra.mrb[0].mxu0 %v228
        %v852 = vpop.f32.mrb[0].mxu0
        %v853 = vadd.f32 %v565, %v852
        %v854 = vpop.f32.mrb[0].mxu0
        %v855 = vadd.f32 %v567, %v854
        %v856 = vpop.f32.mrb[0].mxu0
        %v857 = vadd.f32 %v569, %v856
        %v858 = vpop.f32.mrb[0].mxu0
        %v859 = vadd.f32 %v571, %v858
        %860 = vdwg.mxu0
        %861 = vmatprep.subr.bf16.mxu0 %v739
        %862 = vmatpush1.bf16.msra.mxu0 %v738
        %863 = vmatprep.subr.bf16.mxu0 %v743
        %864 = vmatpush1.bf16.msra.mxu0 %v742
        %865 = vmatprep.subr.bf16.mxu0 %v747
        %866 = vmatpush1.bf16.msra.mxu0 %v746
        %867 = vmatprep.subr.bf16.mxu0 %v751
        %868 = vmatpush1.bf16.msra.mxu0 %v750
        %869 = vmatprep.subr.bf16.mxu0 %v755
        %870 = vmatpush1.bf16.msra.mxu0 %v754
        %871 = vmatprep.subr.bf16.mxu0 %v759
        %872 = vmatpush1.bf16.msra.mxu0 %v758
        %873 = vmatprep.subr.bf16.mxu0 %v763
        %874 = vmatpush1.bf16.msra.mxu0 %v762
        %875 = vmatprep.subr.bf16.mxu0 %v767
        %876 = vmatpush1.bf16.msra.mxu0 %v766
        %877 = vmatprep.subr.bf16.mxu0 %v771
        %878 = vmatpush1.bf16.msra.mxu0 %v770
        %879 = vmatprep.subr.bf16.mxu0 %v775
        %880 = vmatpush1.bf16.msra.mxu0 %v774
        %881 = vmatprep.subr.bf16.mxu0 0
        %882 = vmatpush1.bf16.msra.mxu0 0
        %883 = vmatprep.subr.bf16.mxu0 0
        %884 = vmatpush1.bf16.msra.mxu0 0
        %885 = vmatprep.subr.bf16.mxu0 0
        %886 = vmatpush1.bf16.msra.mxu0 0
        %887 = vmatprep.subr.bf16.mxu0 0
        %888 = vmatpush1.bf16.msra.mxu0 0
        %889 = vmatprep.subr.bf16.mxu0 0
        %890 = vmatpush1.bf16.msra.mxu0 0
        %891 = vmatprep.subr.bf16.mxu0 0
        %892 = vmatpush1.bf16.msra.mxu0 0
        %893 = vmatprep.mubr.bf16.mxu0 %v816
        %894 = vmatmul.mubr.bf16.gmra.mrb[0].mxu0 %v228
        %v895 = vpop.f32.mrb[0].mxu0
        %v896 = vadd.f32 %v608, %v895
        %v897 = vpop.f32.mrb[0].mxu0
        %v898 = vadd.f32 %v610, %v897
        %v899 = vpop.f32.mrb[0].mxu0
        %v900 = vadd.f32 %v612, %v899
        %v901 = vpop.f32.mrb[0].mxu0
        %v902 = vadd.f32 %v614, %v901
        %903 = vdwg.mxu0
        %s904 = scalar_lea.vmem [#allocation7], 640
        %v905 = vld [vmem:[%s904] sm:$0xff]
        %v906 = vld [vmem:[%s904 + $0x8] sm:$0xff]
        %v907 = vld [vmem:[%s904 + $0x10] sm:$0xff]
        %v908 = vld [vmem:[%s904 + $0x18] sm:$0xff]
        %v909 = vld [vmem:[%s904 + $0x20] sm:$0xff]
        %v910 = vld [vmem:[%s904 + $0x28] sm:$0xff]
        %v911 = vld [vmem:[%s904 + $0x30] sm:$0xff]
        %v912 = vld [vmem:[%s904 + $0x38] sm:$0xff]
        %v913 = vld [vmem:[%s904 + $0x40] sm:$0xff]
        %v914 = vld [vmem:[%s904 + $0x48] sm:$0xff]
        %v915 = vld [vmem:[%s904 + $0x50] sm:$0xff]
        %v916 = vld [vmem:[%s904 + $0x58] sm:$0xff]
        %v917 = vld [vmem:[%s904 + $0x60] sm:$0xff]
        %v918 = vld [vmem:[%s904 + $0x68] sm:$0xff]
        %v919 = vld [vmem:[%s904 + $0x70] sm:$0xff]
        %v920 = vld [vmem:[%s904 + $0x78] sm:$0xff]
        %v921 = vld [vmem:[%s904 + $0x80] sm:$0xff]
        %v922 = vld [vmem:[%s904 + $0x88] sm:$0xff]
        %v923 = vld [vmem:[%s904 + $0x90] sm:$0xff]
        %v924 = vld [vmem:[%s904 + $0x98] sm:$0xff]
        %v925 = vld [vmem:[%s904 + $0xa0] sm:$0xff]
        %v926 = vld [vmem:[%s904 + $0xa8] sm:$0xff]
        %v927 = vld [vmem:[%s904 + $0xb0] sm:$0xff]
        %v928 = vld [vmem:[%s904 + $0xb8] sm:$0xff]
        %v929 = vld [vmem:[%s904 + $0xc0] sm:$0xff]
        %v930 = vld [vmem:[%s904 + $0xc8] sm:$0xff]
        %v931 = vld [vmem:[%s904 + $0xd0] sm:$0xff]
        %v932 = vld [vmem:[%s904 + $0xd8] sm:$0xff]
        %v933 = vld [vmem:[%s904 + $0xe0] sm:$0xff]
        %v934 = vld [vmem:[%s904 + $0xe8] sm:$0xff]
        %v935 = vld [vmem:[%s904 + $0xf0] sm:$0xff]
        %v936 = vld [vmem:[%s904 + $0xf8] sm:$0xff]
        %v937 = vld [vmem:[%s904 + $0x100] sm:$0xff]
        %v938 = vld [vmem:[%s904 + $0x108] sm:$0xff]
        %v939 = vld [vmem:[%s904 + $0x110] sm:$0xff]
        %v940 = vld [vmem:[%s904 + $0x118] sm:$0xff]
        %v941 = vld [vmem:[%s904 + $0x120] sm:$0xff]
        %v942 = vld [vmem:[%s904 + $0x128] sm:$0xff]
        %v943 = vld [vmem:[%s904 + $0x130] sm:$0xff]
        %v944 = vld [vmem:[%s904 + $0x138] sm:$0xff]
        %v947 = vrot.slane %v228, 1
        %v948 = vrot.slane %v229, 1
        %v990 = vunpack.c.l.b16 %v905
        %v991 = vunpack.c.h.b16 %v905
        %v992 = vunpack.c.l.b16 %v906
        %v993 = vunpack.c.h.b16 %v906
        %v994 = vunpack.c.l.b16 %v907
        %v995 = vunpack.c.h.b16 %v907
        %v996 = vunpack.c.l.b16 %v908
        %v997 = vunpack.c.h.b16 %v908
        %v998 = vunpack.c.l.b16 %v909
        %v999 = vunpack.c.h.b16 %v909
        %v1000 = vunpack.c.l.b16 %v910
        %v1001 = vunpack.c.h.b16 %v910
        %v1002 = vunpack.c.l.b16 %v911
        %v1003 = vunpack.c.h.b16 %v911
        %v1004 = vunpack.c.l.b16 %v912
        %v1005 = vunpack.c.h.b16 %v912
        %v1006 = vunpack.c.l.b16 %v913
        %v1007 = vunpack.c.h.b16 %v913
        %v1008 = vunpack.c.l.b16 %v914
        %v1009 = vunpack.c.h.b16 %v914
        %v1010 = vunpack.c.l.b16 %v915
        %v1011 = vunpack.c.h.b16 %v915
        %v1012 = vunpack.c.l.b16 %v916
        %v1013 = vunpack.c.h.b16 %v916
        %v1014 = vunpack.c.l.b16 %v917
        %v1015 = vunpack.c.h.b16 %v917
        %v1016 = vunpack.c.l.b16 %v918
        %v1017 = vunpack.c.h.b16 %v918
        %v1018 = vunpack.c.l.b16 %v919
        %v1019 = vunpack.c.h.b16 %v919
        %v1020 = vunpack.c.l.b16 %v920
        %v1021 = vunpack.c.h.b16 %v920
        %v1022 = vunpack.c.l.b16 %v921
        %v1023 = vunpack.c.h.b16 %v921
        %v1024 = vunpack.c.l.b16 %v922
        %v1025 = vunpack.c.h.b16 %v922
        %v1026 = vunpack.c.l.b16 %v923
        %v1027 = vunpack.c.h.b16 %v923
        %v1028 = vunpack.c.l.b16 %v924
        %v1029 = vunpack.c.h.b16 %v924
        %v1030 = vunpack.c.l.b16 %v925
        %v1031 = vunpack.c.h.b16 %v925
        %v1032 = vunpack.c.l.b16 %v926
        %v1033 = vunpack.c.h.b16 %v926
        %v1034 = vunpack.c.l.b16 %v927
        %v1035 = vunpack.c.h.b16 %v927
        %v1036 = vunpack.c.l.b16 %v928
        %v1037 = vunpack.c.h.b16 %v928
        %v1038 = vunpack.c.l.b16 %v929
        %v1039 = vunpack.c.h.b16 %v929
        %v1040 = vunpack.c.l.b16 %v930
        %v1041 = vunpack.c.h.b16 %v930
        %v1042 = vunpack.c.l.b16 %v931
        %v1043 = vunpack.c.h.b16 %v931
        %v1044 = vunpack.c.l.b16 %v932
        %v1045 = vunpack.c.h.b16 %v932
        %v1046 = vunpack.c.l.b16 %v933
        %v1047 = vunpack.c.h.b16 %v933
        %v1048 = vunpack.c.l.b16 %v934
        %v1049 = vunpack.c.h.b16 %v934
        %v1050 = vunpack.c.l.b16 %v935
        %v1051 = vunpack.c.h.b16 %v935
        %v1052 = vunpack.c.l.b16 %v936
        %v1053 = vunpack.c.h.b16 %v936
        %v1054 = vunpack.c.l.b16 %v937
        %v1055 = vunpack.c.h.b16 %v937
        %v1056 = vunpack.c.l.b16 %v938
        %v1057 = vunpack.c.h.b16 %v938
        %v1058 = vunpack.c.l.b16 %v939
        %v1059 = vunpack.c.h.b16 %v939
        %v1060 = vunpack.c.l.b16 %v940
        %v1061 = vunpack.c.h.b16 %v940
        %v1062 = vunpack.c.l.b16 %v941
        %v1063 = vunpack.c.h.b16 %v941
        %v1064 = vunpack.c.l.b16 %v942
        %v1065 = vunpack.c.h.b16 %v942
        %v1066 = vunpack.c.l.b16 %v943
        %v1067 = vunpack.c.h.b16 %v943
        %v1068 = vunpack.c.l.b16 %v944
        %v1069 = vunpack.c.h.b16 %v944
        %v1070 = vpack.c.b16 %v994, %v990
        %v1071 = vpack.c.b16 %v995, %v991
        %v1072 = vpack.c.b16 %v996, %v992
        %v1073 = vpack.c.b16 %v997, %v993
        %v1074 = vpack.c.b16 %v1002, %v998
        %v1075 = vpack.c.b16 %v1003, %v999
        %v1076 = vpack.c.b16 %v1004, %v1000
        %v1077 = vpack.c.b16 %v1005, %v1001
        %v1078 = vpack.c.b16 %v1010, %v1006
        %v1079 = vpack.c.b16 %v1011, %v1007
        %v1080 = vpack.c.b16 %v1012, %v1008
        %v1081 = vpack.c.b16 %v1013, %v1009
        %v1082 = vpack.c.b16 %v1018, %v1014
        %v1083 = vpack.c.b16 %v1019, %v1015
        %v1084 = vpack.c.b16 %v1020, %v1016
        %v1085 = vpack.c.b16 %v1021, %v1017
        %v1086 = vpack.c.b16 %v1026, %v1022
        %v1087 = vpack.c.b16 %v1027, %v1023
        %v1088 = vpack.c.b16 %v1028, %v1024
        %v1089 = vpack.c.b16 %v1029, %v1025
        %v1090 = vpack.c.b16 %v1034, %v1030
        %v1091 = vpack.c.b16 %v1035, %v1031
        %v1092 = vpack.c.b16 %v1036, %v1032
        %v1093 = vpack.c.b16 %v1037, %v1033
        %v1094 = vpack.c.b16 %v1042, %v1038
        %v1095 = vpack.c.b16 %v1043, %v1039
        %v1096 = vpack.c.b16 %v1044, %v1040
        %v1097 = vpack.c.b16 %v1045, %v1041
        %v1098 = vpack.c.b16 %v1050, %v1046
        %v1099 = vpack.c.b16 %v1051, %v1047
        %v1100 = vpack.c.b16 %v1052, %v1048
        %v1101 = vpack.c.b16 %v1053, %v1049
        %v1102 = vpack.c.b16 %v1058, %v1054
        %v1103 = vpack.c.b16 %v1059, %v1055
        %v1104 = vpack.c.b16 %v1060, %v1056
        %v1105 = vpack.c.b16 %v1061, %v1057
        %v1106 = vpack.c.b16 %v1066, %v1062
        %v1107 = vpack.c.b16 %v1067, %v1063
        %v1108 = vpack.c.b16 %v1068, %v1064
        %v1109 = vpack.c.b16 %v1069, %v1065
        %v1151 = vsel %vm526, %v948, 0
        %1153 = vmatprep.subr.bf16.mxu0 %v1071
        %1154 = vmatpush1.bf16.msra.mxu0 %v1070
        %1155 = vmatprep.subr.bf16.mxu0 %v1075
        %1156 = vmatpush1.bf16.msra.mxu0 %v1074
        %1157 = vmatprep.subr.bf16.mxu0 %v1079
        %1158 = vmatpush1.bf16.msra.mxu0 %v1078
        %1159 = vmatprep.subr.bf16.mxu0 %v1083
        %1160 = vmatpush1.bf16.msra.mxu0 %v1082
        %1161 = vmatprep.subr.bf16.mxu0 %v1087
        %1162 = vmatpush1.bf16.msra.mxu0 %v1086
        %1163 = vmatprep.subr.bf16.mxu0 %v1091
        %1164 = vmatpush1.bf16.msra.mxu0 %v1090
        %1165 = vmatprep.subr.bf16.mxu0 %v1095
        %1166 = vmatpush1.bf16.msra.mxu0 %v1094
        %1167 = vmatprep.subr.bf16.mxu0 %v1099
        %1168 = vmatpush1.bf16.msra.mxu0 %v1098
        %1169 = vmatprep.subr.bf16.mxu0 %v1103
        %1170 = vmatpush1.bf16.msra.mxu0 %v1102
        %1171 = vmatprep.subr.bf16.mxu0 %v1107
        %1172 = vmatpush1.bf16.msra.mxu0 %v1106
        %1173 = vmatprep.subr.bf16.mxu0 0
        %1174 = vmatpush1.bf16.msra.mxu0 0
        %1175 = vmatprep.subr.bf16.mxu0 0
        %1176 = vmatpush1.bf16.msra.mxu0 0
        %1177 = vmatprep.subr.bf16.mxu0 0
        %1178 = vmatpush1.bf16.msra.mxu0 0
        %1179 = vmatprep.subr.bf16.mxu0 0
        %1180 = vmatpush1.bf16.msra.mxu0 0
        %1181 = vmatprep.subr.bf16.mxu0 0
        %1182 = vmatpush1.bf16.msra.mxu0 0
        %1183 = vmatprep.subr.bf16.mxu0 0
        %1184 = vmatpush1.bf16.msra.mxu0 0
        %1185 = vmatprep.mubr.bf16.mxu0 %v1151
        %1186 = vmatmul.mubr.bf16.gmra.mrb[0].mxu0 %v947
        %v1187 = vpop.f32.mrb[0].mxu0
        %v1188 = vadd.f32 0.0, %v1187
        %v1189 = vpop.f32.mrb[0].mxu0
        %v1190 = vadd.f32 0.0, %v1189
        %v1191 = vpop.f32.mrb[0].mxu0
        %v1192 = vadd.f32 0.0, %v1191
        %v1193 = vpop.f32.mrb[0].mxu0
        %v1194 = vadd.f32 0.0, %v1193
        %1195 = vdwg.mxu0
        %1196 = vmatprep.subr.bf16.mxu0 %v1073
        %1197 = vmatpush1.bf16.msra.mxu0 %v1072
        %1198 = vmatprep.subr.bf16.mxu0 %v1077
        %1199 = vmatpush1.bf16.msra.mxu0 %v1076
        %1200 = vmatprep.subr.bf16.mxu0 %v1081
        %1201 = vmatpush1.bf16.msra.mxu0 %v1080
        %1202 = vmatprep.subr.bf16.mxu0 %v1085
        %1203 = vmatpush1.bf16.msra.mxu0 %v1084
        %1204 = vmatprep.subr.bf16.mxu0 %v1089
        %1205 = vmatpush1.bf16.msra.mxu0 %v1088
        %1206 = vmatprep.subr.bf16.mxu0 %v1093
        %1207 = vmatpush1.bf16.msra.mxu0 %v1092
        %1208 = vmatprep.subr.bf16.mxu0 %v1097
        %1209 = vmatpush1.bf16.msra.mxu0 %v1096
        %1210 = vmatprep.subr.bf16.mxu0 %v1101
        %1211 = vmatpush1.bf16.msra.mxu0 %v1100
        %1212 = vmatprep.subr.bf16.mxu0 %v1105
        %1213 = vmatpush1.bf16.msra.mxu0 %v1104
        %1214 = vmatprep.subr.bf16.mxu0 %v1109
        %1215 = vmatpush1.bf16.msra.mxu0 %v1108
        %1216 = vmatprep.subr.bf16.mxu0 0
        %1217 = vmatpush1.bf16.msra.mxu0 0
        %1218 = vmatprep.subr.bf16.mxu0 0
        %1219 = vmatpush1.bf16.msra.mxu0 0
        %1220 = vmatprep.subr.bf16.mxu0 0
        %1221 = vmatpush1.bf16.msra.mxu0 0
        %1222 = vmatprep.subr.bf16.mxu0 0
        %1223 = vmatpush1.bf16.msra.mxu0 0
        %1224 = vmatprep.subr.bf16.mxu0 0
        %1225 = vmatpush1.bf16.msra.mxu0 0
        %1226 = vmatprep.subr.bf16.mxu0 0
        %1227 = vmatpush1.bf16.msra.mxu0 0
        %1228 = vmatprep.mubr.bf16.mxu0 %v1151
        %1229 = vmatmul.mubr.bf16.gmra.mrb[0].mxu0 %v947
        %v1230 = vpop.f32.mrb[0].mxu0
        %v1231 = vadd.f32 0.0, %v1230
        %v1232 = vpop.f32.mrb[0].mxu0
        %v1233 = vadd.f32 0.0, %v1232
        %v1234 = vpop.f32.mrb[0].mxu0
        %v1235 = vadd.f32 0.0, %v1234
        %v1236 = vpop.f32.mrb[0].mxu0
        %v1237 = vadd.f32 0.0, %v1236
        %1238 = vdwg.mxu0
        %v1239 = vadd.f32 %v853, %v1188
        %v1240 = vadd.f32 %v855, %v1190
        %v1241 = vadd.f32 %v896, %v1231
        %v1242 = vadd.f32 %v898, %v1233
        %v1243 = vadd.f32 %v857, %v1192
        %v1244 = vadd.f32 %v859, %v1194
        %v1245 = vadd.f32 %v900, %v1235
        %v1246 = vadd.f32 %v902, %v1237
        %s1247 = scalar_lea.vmem [#allocation7], 960
        %v1248 = vld [vmem:[%s1247] sm:$0xff]
        %v1249 = vld [vmem:[%s1247 + $0x8] sm:$0xff]
        %v1250 = vld [vmem:[%s1247 + $0x10] sm:$0xff]
        %v1251 = vld [vmem:[%s1247 + $0x18] sm:$0xff]
        %v1252 = vld [vmem:[%s1247 + $0x20] sm:$0xff]
        %v1253 = vld [vmem:[%s1247 + $0x28] sm:$0xff]
        %v1254 = vld [vmem:[%s1247 + $0x30] sm:$0xff]
        %v1255 = vld [vmem:[%s1247 + $0x38] sm:$0xff]
        %v1256 = vld [vmem:[%s1247 + $0x40] sm:$0xff]
        %v1257 = vld [vmem:[%s1247 + $0x48] sm:$0xff]
        %v1258 = vld [vmem:[%s1247 + $0x50] sm:$0xff]
        %v1259 = vld [vmem:[%s1247 + $0x58] sm:$0xff]
        %v1260 = vld [vmem:[%s1247 + $0x60] sm:$0xff]
        %v1261 = vld [vmem:[%s1247 + $0x68] sm:$0xff]
        %v1262 = vld [vmem:[%s1247 + $0x70] sm:$0xff]
        %v1263 = vld [vmem:[%s1247 + $0x78] sm:$0xff]
        %v1264 = vld [vmem:[%s1247 + $0x80] sm:$0xff]
        %v1265 = vld [vmem:[%s1247 + $0x88] sm:$0xff]
        %v1266 = vld [vmem:[%s1247 + $0x90] sm:$0xff]
        %v1267 = vld [vmem:[%s1247 + $0x98] sm:$0xff]
        %v1268 = vld [vmem:[%s1247 + $0xa0] sm:$0xff]
        %v1269 = vld [vmem:[%s1247 + $0xa8] sm:$0xff]
        %v1270 = vld [vmem:[%s1247 + $0xb0] sm:$0xff]
        %v1271 = vld [vmem:[%s1247 + $0xb8] sm:$0xff]
        %v1272 = vld [vmem:[%s1247 + $0xc0] sm:$0xff]
        %v1273 = vld [vmem:[%s1247 + $0xc8] sm:$0xff]
        %v1274 = vld [vmem:[%s1247 + $0xd0] sm:$0xff]
        %v1275 = vld [vmem:[%s1247 + $0xd8] sm:$0xff]
        %v1276 = vld [vmem:[%s1247 + $0xe0] sm:$0xff]
        %v1277 = vld [vmem:[%s1247 + $0xe8] sm:$0xff]
        %v1278 = vld [vmem:[%s1247 + $0xf0] sm:$0xff]
        %v1279 = vld [vmem:[%s1247 + $0xf8] sm:$0xff]
        %v1280 = vld [vmem:[%s1247 + $0x100] sm:$0xff]
        %v1281 = vld [vmem:[%s1247 + $0x108] sm:$0xff]
        %v1282 = vld [vmem:[%s1247 + $0x110] sm:$0xff]
        %v1283 = vld [vmem:[%s1247 + $0x118] sm:$0xff]
        %v1284 = vld [vmem:[%s1247 + $0x120] sm:$0xff]
        %v1285 = vld [vmem:[%s1247 + $0x128] sm:$0xff]
        %v1286 = vld [vmem:[%s1247 + $0x130] sm:$0xff]
        %v1287 = vld [vmem:[%s1247 + $0x138] sm:$0xff]
        %v1288 = vrot.slane %v312, 1
        %v1289 = vrot.slane %v314, 2
        %v1290 = vor.u32 %v1288, %v1289
        %v1291 = vrot.slane %v319, 1
        %v1292 = vrot.slane %v321, 2
        %v1293 = vor.u32 %v1291, %v1292
        %v1335 = vunpack.c.l.b16 %v1248
        %v1336 = vunpack.c.h.b16 %v1248
        %v1337 = vunpack.c.l.b16 %v1249
        %v1338 = vunpack.c.h.b16 %v1249
        %v1339 = vunpack.c.l.b16 %v1250
        %v1340 = vunpack.c.h.b16 %v1250
        %v1341 = vunpack.c.l.b16 %v1251
        %v1342 = vunpack.c.h.b16 %v1251
        %v1343 = vunpack.c.l.b16 %v1252
        %v1344 = vunpack.c.h.b16 %v1252
        %v1345 = vunpack.c.l.b16 %v1253
        %v1346 = vunpack.c.h.b16 %v1253
        %v1347 = vunpack.c.l.b16 %v1254
        %v1348 = vunpack.c.h.b16 %v1254
        %v1349 = vunpack.c.l.b16 %v1255
        %v1350 = vunpack.c.h.b16 %v1255
        %v1351 = vunpack.c.l.b16 %v1256
        %v1352 = vunpack.c.h.b16 %v1256
        %v1353 = vunpack.c.l.b16 %v1257
        %v1354 = vunpack.c.h.b16 %v1257
        %v1355 = vunpack.c.l.b16 %v1258
        %v1356 = vunpack.c.h.b16 %v1258
        %v1357 = vunpack.c.l.b16 %v1259
        %v1358 = vunpack.c.h.b16 %v1259
        %v1359 = vunpack.c.l.b16 %v1260
        %v1360 = vunpack.c.h.b16 %v1260
        %v1361 = vunpack.c.l.b16 %v1261
        %v1362 = vunpack.c.h.b16 %v1261
        %v1363 = vunpack.c.l.b16 %v1262
        %v1364 = vunpack.c.h.b16 %v1262
        %v1365 = vunpack.c.l.b16 %v1263
        %v1366 = vunpack.c.h.b16 %v1263
        %v1367 = vunpack.c.l.b16 %v1264
        %v1368 = vunpack.c.h.b16 %v1264
        %v1369 = vunpack.c.l.b16 %v1265
        %v1370 = vunpack.c.h.b16 %v1265
        %v1371 = vunpack.c.l.b16 %v1266
        %v1372 = vunpack.c.h.b16 %v1266
        %v1373 = vunpack.c.l.b16 %v1267
        %v1374 = vunpack.c.h.b16 %v1267
        %v1375 = vunpack.c.l.b16 %v1268
        %v1376 = vunpack.c.h.b16 %v1268
        %v1377 = vunpack.c.l.b16 %v1269
        %v1378 = vunpack.c.h.b16 %v1269
        %v1379 = vunpack.c.l.b16 %v1270
        %v1380 = vunpack.c.h.b16 %v1270
        %v1381 = vunpack.c.l.b16 %v1271
        %v1382 = vunpack.c.h.b16 %v1271
        %v1383 = vunpack.c.l.b16 %v1272
        %v1384 = vunpack.c.h.b16 %v1272
        %v1385 = vunpack.c.l.b16 %v1273
        %v1386 = vunpack.c.h.b16 %v1273
        %v1387 = vunpack.c.l.b16 %v1274
        %v1388 = vunpack.c.h.b16 %v1274
        %v1389 = vunpack.c.l.b16 %v1275
        %v1390 = vunpack.c.h.b16 %v1275
        %v1391 = vunpack.c.l.b16 %v1276
        %v1392 = vunpack.c.h.b16 %v1276
        %v1393 = vunpack.c.l.b16 %v1277
        %v1394 = vunpack.c.h.b16 %v1277
        %v1395 = vunpack.c.l.b16 %v1278
        %v1396 = vunpack.c.h.b16 %v1278
        %v1397 = vunpack.c.l.b16 %v1279
        %v1398 = vunpack.c.h.b16 %v1279
        %v1399 = vunpack.c.l.b16 %v1280
        %v1400 = vunpack.c.h.b16 %v1280
        %v1401 = vunpack.c.l.b16 %v1281
        %v1402 = vunpack.c.h.b16 %v1281
        %v1403 = vunpack.c.l.b16 %v1282
        %v1404 = vunpack.c.h.b16 %v1282
        %v1405 = vunpack.c.l.b16 %v1283
        %v1406 = vunpack.c.h.b16 %v1283
        %v1407 = vunpack.c.l.b16 %v1284
        %v1408 = vunpack.c.h.b16 %v1284
        %v1409 = vunpack.c.l.b16 %v1285
        %v1410 = vunpack.c.h.b16 %v1285
        %v1411 = vunpack.c.l.b16 %v1286
        %v1412 = vunpack.c.h.b16 %v1286
        %v1413 = vunpack.c.l.b16 %v1287
        %v1414 = vunpack.c.h.b16 %v1287
        %v1415 = vpack.c.b16 %v1339, %v1335
        %v1416 = vpack.c.b16 %v1340, %v1336
        %v1417 = vpack.c.b16 %v1341, %v1337
        %v1418 = vpack.c.b16 %v1342, %v1338
        %v1419 = vpack.c.b16 %v1347, %v1343
        %v1420 = vpack.c.b16 %v1348, %v1344
        %v1421 = vpack.c.b16 %v1349, %v1345
        %v1422 = vpack.c.b16 %v1350, %v1346
        %v1423 = vpack.c.b16 %v1355, %v1351
        %v1424 = vpack.c.b16 %v1356, %v1352
        %v1425 = vpack.c.b16 %v1357, %v1353
        %v1426 = vpack.c.b16 %v1358, %v1354
        %v1427 = vpack.c.b16 %v1363, %v1359
        %v1428 = vpack.c.b16 %v1364, %v1360
        %v1429 = vpack.c.b16 %v1365, %v1361
        %v1430 = vpack.c.b16 %v1366, %v1362
        %v1431 = vpack.c.b16 %v1371, %v1367
        %v1432 = vpack.c.b16 %v1372, %v1368
        %v1433 = vpack.c.b16 %v1373, %v1369
        %v1434 = vpack.c.b16 %v1374, %v1370
        %v1435 = vpack.c.b16 %v1379, %v1375
        %v1436 = vpack.c.b16 %v1380, %v1376
        %v1437 = vpack.c.b16 %v1381, %v1377
        %v1438 = vpack.c.b16 %v1382, %v1378
        %v1439 = vpack.c.b16 %v1387, %v1383
        %v1440 = vpack.c.b16 %v1388, %v1384
        %v1441 = vpack.c.b16 %v1389, %v1385
        %v1442 = vpack.c.b16 %v1390, %v1386
        %v1443 = vpack.c.b16 %v1395, %v1391
        %v1444 = vpack.c.b16 %v1396, %v1392
        %v1445 = vpack.c.b16 %v1397, %v1393
        %v1446 = vpack.c.b16 %v1398, %v1394
        %v1447 = vpack.c.b16 %v1403, %v1399
        %v1448 = vpack.c.b16 %v1404, %v1400
        %v1449 = vpack.c.b16 %v1405, %v1401
        %v1450 = vpack.c.b16 %v1406, %v1402
        %v1451 = vpack.c.b16 %v1411, %v1407
        %v1452 = vpack.c.b16 %v1412, %v1408
        %v1453 = vpack.c.b16 %v1413, %v1409
        %v1454 = vpack.c.b16 %v1414, %v1410
        %v1496 = vsel %vm526, %v1293, 0
        %1498 = vmatprep.subr.bf16.mxu0 %v1416
        %1499 = vmatpush1.bf16.msra.mxu0 %v1415
        %1500 = vmatprep.subr.bf16.mxu0 %v1420
        %1501 = vmatpush1.bf16.msra.mxu0 %v1419
        %1502 = vmatprep.subr.bf16.mxu0 %v1424
        %1503 = vmatpush1.bf16.msra.mxu0 %v1423
        %1504 = vmatprep.subr.bf16.mxu0 %v1428
        %1505 = vmatpush1.bf16.msra.mxu0 %v1427
        %1506 = vmatprep.subr.bf16.mxu0 %v1432
        %1507 = vmatpush1.bf16.msra.mxu0 %v1431
        %1508 = vmatprep.subr.bf16.mxu0 %v1436
        %1509 = vmatpush1.bf16.msra.mxu0 %v1435
        %1510 = vmatprep.subr.bf16.mxu0 %v1440
        %1511 = vmatpush1.bf16.msra.mxu0 %v1439
        %1512 = vmatprep.subr.bf16.mxu0 %v1444
        %1513 = vmatpush1.bf16.msra.mxu0 %v1443
        %1514 = vmatprep.subr.bf16.mxu0 %v1448
        %1515 = vmatpush1.bf16.msra.mxu0 %v1447
        %1516 = vmatprep.subr.bf16.mxu0 %v1452
        %1517 = vmatpush1.bf16.msra.mxu0 %v1451
        %1518 = vmatprep.subr.bf16.mxu0 0
        %1519 = vmatpush1.bf16.msra.mxu0 0
        %1520 = vmatprep.subr.bf16.mxu0 0
        %1521 = vmatpush1.bf16.msra.mxu0 0
        %1522 = vmatprep.subr.bf16.mxu0 0
        %1523 = vmatpush1.bf16.msra.mxu0 0
        %1524 = vmatprep.subr.bf16.mxu0 0
        %1525 = vmatpush1.bf16.msra.mxu0 0
        %1526 = vmatprep.subr.bf16.mxu0 0
        %1527 = vmatpush1.bf16.msra.mxu0 0
        %1528 = vmatprep.subr.bf16.mxu0 0
        %1529 = vmatpush1.bf16.msra.mxu0 0
        %1530 = vmatprep.mubr.bf16.mxu0 %v1496
        %1531 = vmatmul.mubr.bf16.gmra.mrb[0].mxu0 %v1290
        %v1532 = vpop.f32.mrb[0].mxu0
        %v1533 = vadd.f32 0.0, %v1532
        %v1534 = vpop.f32.mrb[0].mxu0
        %v1535 = vadd.f32 0.0, %v1534
        %v1536 = vpop.f32.mrb[0].mxu0
        %v1537 = vadd.f32 0.0, %v1536
        %v1538 = vpop.f32.mrb[0].mxu0
        %v1539 = vadd.f32 0.0, %v1538
        %1540 = vdwg.mxu0
        %1541 = vmatprep.subr.bf16.mxu0 %v1418
        %1542 = vmatpush1.bf16.msra.mxu0 %v1417
        %1543 = vmatprep.subr.bf16.mxu0 %v1422
        %1544 = vmatpush1.bf16.msra.mxu0 %v1421
        %1545 = vmatprep.subr.bf16.mxu0 %v1426
        %1546 = vmatpush1.bf16.msra.mxu0 %v1425
        %1547 = vmatprep.subr.bf16.mxu0 %v1430
        %1548 = vmatpush1.bf16.msra.mxu0 %v1429
        %1549 = vmatprep.subr.bf16.mxu0 %v1434
        %1550 = vmatpush1.bf16.msra.mxu0 %v1433
        %1551 = vmatprep.subr.bf16.mxu0 %v1438
        %1552 = vmatpush1.bf16.msra.mxu0 %v1437
        %1553 = vmatprep.subr.bf16.mxu0 %v1442
        %1554 = vmatpush1.bf16.msra.mxu0 %v1441
        %1555 = vmatprep.subr.bf16.mxu0 %v1446
        %1556 = vmatpush1.bf16.msra.mxu0 %v1445
        %1557 = vmatprep.subr.bf16.mxu0 %v1450
        %1558 = vmatpush1.bf16.msra.mxu0 %v1449
        %1559 = vmatprep.subr.bf16.mxu0 %v1454
        %1560 = vmatpush1.bf16.msra.mxu0 %v1453
        %1561 = vmatprep.subr.bf16.mxu0 0
        %1562 = vmatpush1.bf16.msra.mxu0 0
        %1563 = vmatprep.subr.bf16.mxu0 0
        %1564 = vmatpush1.bf16.msra.mxu0 0
        %1565 = vmatprep.subr.bf16.mxu0 0
        %1566 = vmatpush1.bf16.msra.mxu0 0
        %1567 = vmatprep.subr.bf16.mxu0 0
        %1568 = vmatpush1.bf16.msra.mxu0 0
        %1569 = vmatprep.subr.bf16.mxu0 0
        %1570 = vmatpush1.bf16.msra.mxu0 0
        %1571 = vmatprep.subr.bf16.mxu0 0
        %1572 = vmatpush1.bf16.msra.mxu0 0
        %1573 = vmatprep.mubr.bf16.mxu0 %v1496
        %1574 = vmatmul.mubr.bf16.gmra.mrb[0].mxu0 %v1290
        %v1575 = vpop.f32.mrb[0].mxu0
        %v1576 = vadd.f32 0.0, %v1575
        %v1577 = vpop.f32.mrb[0].mxu0
        %v1578 = vadd.f32 0.0, %v1577
        %v1579 = vpop.f32.mrb[0].mxu0
        %v1580 = vadd.f32 0.0, %v1579
        %v1581 = vpop.f32.mrb[0].mxu0
        %v1582 = vadd.f32 0.0, %v1581
        %1583 = vdwg.mxu0
        %v1584 = vadd.f32 %v1239, %v1533
        %v1585 = vadd.f32 %v1240, %v1535
        %v1586 = vadd.f32 %v1241, %v1576
        %v1587 = vadd.f32 %v1242, %v1578
        %v1588 = vadd.f32 %v1243, %v1537
        %v1589 = vadd.f32 %v1244, %v1539
        %v1590 = vadd.f32 %v1245, %v1580
        %v1591 = vadd.f32 %v1246, %v1582
        %v1592 = vmul.f32 %v1584, %v1584
        %v1593 = vmul.f32 %v1585, %v1585
        %v1594 = vmul.f32 %v1588, %v1588
        %v1595 = vmul.f32 %v1589, %v1589
        %v1596 = vmul.f32 %v1586, %v1586
        %v1597 = vmul.f32 %v1587, %v1587
        %v1598 = vmul.f32 %v1590, %v1590
        %v1599 = vmul.f32 %v1591, %v1591
        %v1600 = vadd.f32 %v1592, %v1596
        %v1601 = vadd.f32 %v1593, %v1597
        %v1602 = vadd.f32 %v1594, %v1598
        %v1603 = vadd.f32 %v1595, %v1599
        %v1604 = vld [vmem:[#allocation9] sm:$0xff]
        %v1605 = vld [vmem:[#allocation9 + $0x8] sm:$0xff]
        %v1606 = vld [vmem:[#allocation9 + $0x10] sm:$0xff]
        %v1607 = vld [vmem:[#allocation9 + $0x18] sm:$0xff]
        %v1608 = vld [vmem:[#allocation9 + $0x20] sm:$0xff]
        %v1609 = vld [vmem:[#allocation9 + $0x28] sm:$0xff]
        %v1610 = vld [vmem:[#allocation9 + $0x30] sm:$0xff]
        %v1611 = vld [vmem:[#allocation9 + $0x38] sm:$0xff]
        %v1612 = vld [vmem:[#allocation9 + $0x40] sm:$0xff]
        %v1613 = vld [vmem:[#allocation9 + $0x48] sm:$0xff]
        %v1614 = vld [vmem:[#allocation9 + $0x50] sm:$0xff]
        %v1615 = vld [vmem:[#allocation9 + $0x58] sm:$0xff]
        %v1616 = vld [vmem:[#allocation9 + $0x60] sm:$0xff]
        %v1617 = vld [vmem:[#allocation9 + $0x68] sm:$0xff]
        %v1618 = vld [vmem:[#allocation9 + $0x70] sm:$0xff]
        %v1619 = vld [vmem:[#allocation9 + $0x78] sm:$0xff]
        %v1620 = vld [vmem:[#allocation9 + $0x80] sm:$0xff]
        %v1621 = vld [vmem:[#allocation9 + $0x88] sm:$0xff]
        %v1622 = vld [vmem:[#allocation9 + $0x90] sm:$0xff]
        %v1623 = vld [vmem:[#allocation9 + $0x98] sm:$0xff]
        %v1624 = vld [vmem:[#allocation9 + $0xa0] sm:$0xff]
        %v1625 = vld [vmem:[#allocation9 + $0xa8] sm:$0xff]
        %v1626 = vld [vmem:[#allocation9 + $0xb0] sm:$0xff]
        %v1627 = vld [vmem:[#allocation9 + $0xb8] sm:$0xff]
        %v1628 = vld [vmem:[#allocation9 + $0xc0] sm:$0xff]
        %v1629 = vld [vmem:[#allocation9 + $0xc8] sm:$0xff]
        %v1630 = vld [vmem:[#allocation9 + $0xd0] sm:$0xff]
        %v1631 = vld [vmem:[#allocation9 + $0xd8] sm:$0xff]
        %v1632 = vld [vmem:[#allocation9 + $0xe0] sm:$0xff]
        %v1633 = vld [vmem:[#allocation9 + $0xe8] sm:$0xff]
        %v1634 = vld [vmem:[#allocation9 + $0xf0] sm:$0xff]
        %v1635 = vld [vmem:[#allocation9 + $0xf8] sm:$0xff]
        %1636 = vmatprep.subr.mxu0 0.0
        %1637 = vmatpush1.msra.mxu0 %v1604
        %1638 = vmatprep.subr.mxu0 0.0
        %1639 = vmatpush1.msra.mxu0 %v1605
        %1640 = vmatprep.subr.mxu0 0.0
        %1641 = vmatpush1.msra.mxu0 %v1606
        %1642 = vmatprep.subr.mxu0 0.0
        %1643 = vmatpush1.msra.mxu0 %v1607
        %1644 = vmatprep.subr.mxu0 0.0
        %1645 = vmatpush1.msra.mxu0 %v1608
        %1646 = vmatprep.subr.mxu0 0.0
        %1647 = vmatpush1.msra.mxu0 %v1609
        %1648 = vmatprep.subr.mxu0 0.0
        %1649 = vmatpush1.msra.mxu0 %v1610
        %1650 = vmatprep.subr.mxu0 0.0
        %1651 = vmatpush1.msra.mxu0 %v1611
        %1652 = vmatprep.subr.mxu0 0.0
        %1653 = vmatpush1.msra.mxu0 %v1612
        %1654 = vmatprep.subr.mxu0 0.0
        %1655 = vmatpush1.msra.mxu0 %v1613
        %1656 = vmatprep.subr.mxu0 0.0
        %1657 = vmatpush1.msra.mxu0 %v1614
        %1658 = vmatprep.subr.mxu0 0.0
        %1659 = vmatpush1.msra.mxu0 %v1615
        %1660 = vmatprep.subr.mxu0 0.0
        %1661 = vmatpush1.msra.mxu0 %v1616
        %1662 = vmatprep.subr.mxu0 0.0
        %1663 = vmatpush1.msra.mxu0 %v1617
        %1664 = vmatprep.subr.mxu0 0.0
        %1665 = vmatpush1.msra.mxu0 %v1618
        %1666 = vmatprep.subr.mxu0 0.0
        %1667 = vmatpush1.msra.mxu0 %v1619
        %1668 = vmatprep.subr.mxu0 0.0
        %1669 = vmatpush1.msra.mxu0 %v1620
        %1670 = vmatprep.subr.mxu0 0.0
        %1671 = vmatpush1.msra.mxu0 %v1621
        %1672 = vmatprep.subr.mxu0 0.0
        %1673 = vmatpush1.msra.mxu0 %v1622
        %1674 = vmatprep.subr.mxu0 0.0
        %1675 = vmatpush1.msra.mxu0 %v1623
        %1676 = vmatprep.subr.mxu0 0.0
        %1677 = vmatpush1.msra.mxu0 %v1624
        %1678 = vmatprep.subr.mxu0 0.0
        %1679 = vmatpush1.msra.mxu0 %v1625
        %1680 = vmatprep.subr.mxu0 0.0
        %1681 = vmatpush1.msra.mxu0 %v1626
        %1682 = vmatprep.subr.mxu0 0.0
        %1683 = vmatpush1.msra.mxu0 %v1627
        %1684 = vmatprep.subr.mxu0 0.0
        %1685 = vmatpush1.msra.mxu0 %v1628
        %1686 = vmatprep.subr.mxu0 0.0
        %1687 = vmatpush1.msra.mxu0 %v1629
        %1688 = vmatprep.subr.mxu0 0.0
        %1689 = vmatpush1.msra.mxu0 %v1630
        %1690 = vmatprep.subr.mxu0 0.0
        %1691 = vmatpush1.msra.mxu0 %v1631
        %1692 = vmatprep.subr.mxu0 0.0
        %1693 = vmatpush1.msra.mxu0 %v1632
        %1694 = vmatprep.subr.mxu0 0.0
        %1695 = vmatpush1.msra.mxu0 %v1633
        %1696 = vmatprep.subr.mxu0 0.0
        %1697 = vmatpush1.msra.mxu0 %v1634
        %1698 = vmatprep.subr.mxu0 0.0
        %1699 = vmatpush1.msra.mxu0 %v1635
        %1700 = vmatprep.mubr.f32.mxu0 %v1601
        %1701 = vmatmul.mubr.f32.gmra.mrb[0].mxu0 %v1600
        %v1702 = vpop.f32.mrb[0].mxu0
        %v1703 = vadd.f32 1e-06, %v1702
        %v1704 = vpop.f32.mrb[0].mxu0
        %1705 = vmatprep.mubr.f32.mxu0 %v1603
        %1706 = vmatmul.mubr.f32.gmra.mrb[0].mxu0 %v1602
        %v1707 = vpop.f32.mrb[0].mxu0
        %v1708 = vadd.f32 1e-06, %v1707
        %v1709 = vpop.f32.mrb[0].mxu0
        %1710 = vdwg.mxu0
        %v1711 = vlog2.pop %v1703
        %v1712 = vmul.f32 %v1711, 0.6931472
        %v1713 = vlog2.pop %v1708
        %v1714 = vmul.f32 %v1713, 0.6931472
        %vm1715 = vcmask 1042432
        %v1716 = vsel %vm1715, %v1714, 0.0
        %v1717 = vadd.f32 %v1712, %v1716
        %v1718 = vrot.slane %v1717, 4
        %v1719 = vadd.f32 %v1717, %v1718
        %v1720 = vrot.slane %v1719, 2
        %v1721 = vadd.f32 %v1719, %v1720
        %v1722 = vrot.slane %v1721, 1
        %v1723 = vadd.f32 %v1721, %v1722
        %v1724 = vrcp.pop 11.0
        %v1725 = vmul.f32 %v1723, %v1724
        %v1726 = vsub.f32 %v1712, %v1725
        %v1727 = vsub.f32 %v1714, %v1725
        %s1728 = smul.u32 %s26, 128
        %s1729 = sld [smem:[#allocation3 + %s1728]]
        %s1730 = sadd.s32 %s1728, 1
        %s1731 = sld [smem:[#allocation3 + %s1730]]
        %s1732 = sadd.s32 %s1728, 2
        %s1733 = sld [smem:[#allocation3 + %s1732]]
        %s1734 = sadd.s32 %s1728, 3
        %s1735 = sld [smem:[#allocation3 + %s1734]]
        %v1736 = vlaneseq
        %v1737 = vshrl.u32 %v1736, 7
        %v1738 = vadd.s32 %v1737, 8
        %v1739 = vlaneseq
        %v1740 = vand.u32 %v1739, 127
        %v1741 = vstv %s1729
        %vm1742 = vcmp.ge.s32.totalorder %v1737, %v1741
        %vm1743 = vcmp.ge.s32.totalorder %v1738, %v1741
        %s1744 = sadd.s32 %s1729, %s1731
        %v1745 = vstv %s1744
        %vm1746 = vcmp.lt.s32.totalorder %v1737, %v1745
        %vm1747 = vcmp.lt.s32.totalorder %v1738, %v1745
        %vm1748 = vmand %vm1742, %vm1746
        %vm1749 = vmand %vm1743, %vm1747
        %v1750 = vstv %s1733
        %vm1751 = vcmp.ge.s32.totalorder %v1740, %v1750
        %s1752 = sadd.s32 %s1733, %s1735
        %v1753 = vstv %s1752
        %vm1754 = vcmp.lt.s32.totalorder %v1740, %v1753
        %vm1755 = vmand %vm1751, %vm1754
        %v1756 = vsel %vm1748, 1, 0
        %v1757 = vsel %vm1749, 1, 0
        %vm1758 = vcmp.eq.s32.totalorder %v1756, 1
        %vm1759 = vcmp.eq.s32.totalorder %v1757, 1
        %v1760 = vsel %vm1755, 1, 0
        %vm1761 = vcmp.eq.s32.totalorder %v1760, 1
        %vm1762 = vmor %vm1758, %vm1761
        %vm1763 = vmor %vm1759, %vm1761
        %v1764 = vsel %vm1762, 0.0, %v1726
        %v1765 = vsel %vm1763, 0.0, %v1727
        %1766 = vst [vmem:[%s222] sm:$0xff] %v1764
        %1767 = vst [vmem:[%s222 + $0x8] sm:$0x7] %v1765
        %s1768 = sand.u32 %s102, 1
        %s1769 = scalar_lea.sflag [#allocation6], %s1768
        %s1770 = sand.u32 %s102, 1
        %s1771 = smul.addr %s1770, 16
        %s1772 = scalar_lea.vmem [#allocation10], %s1771
        // Predicated region
        $region45: #{fbank_aug_forward.3} parent=31 // pred_check
          %p1773 = pneg %p112
        $region46: #{fbank_aug_forward.3} parent=31 // pred_check_branch
          %1775 = sbr.rel (%p1773) target = $region48
        $region47: #{fbank_aug_forward.3} parent=31 // pred_region
          %s1777 = ssub.s32 256, 256
          %1778 = vsyncadd %s1769, %s1777
          %s1779 = smul.addr %s26, 2
          %s1780 = smul.addr %s1779, 128
          %s1781 = scalar_lea.hbm %s4, %s1780
          %s1782 = sshll.u32 %s1772, 4
          %s1783 = int_to_ptr.vmem [resolvable:$true] %s1782
          %1788 = dma.vmem_to_hbm [thread:$0]  %s1783, 256, %s1781, %s1769, 128, 128, 8
        $region48: #{fbank_aug_forward.3} parent=31 // pred_fallthru
          _
      $region32: #{fbank_aug_forward.3} parent=5 // pred_fallthru
        _
      %p1789 = scmp.le.s32.totalorder 2, %s21
      // Predicated region
      $region49: #{fbank_aug_forward.3} parent=5 // pred_check
        %p1790 = pneg %p1789
      $region50: #{fbank_aug_forward.3} parent=5 // pred_check_branch
        %1792 = sbr.rel (%p1790) target = $region52
      $region51: #{fbank_aug_forward.3} parent=5 // pred_region
        %s1793 = ssub.s32 %s21, 2
        // Predicated region
        $region53: #{fbank_aug_forward.3} parent=51 // pred_check
          %p1794 = pneg %p118
        $region54: #{fbank_aug_forward.3} parent=51 // pred_check_branch
          %1796 = sbr.rel (%p1794) target = $region56
        $region55: #{fbank_aug_forward.3} parent=51 // pred_region
          %s1797 = sand.u32 %s103, 1
          %s1798 = scalar_lea.sflag [#allocation6], %s1797
          %s1799 = sand.u32 %s103, 1
          %s1800 = smul.addr %s1799, 16
          %s1801 = scalar_lea.vmem [#allocation10], %s1800
          %1802 = dma.done %s1798, 256
        $region56: #{fbank_aug_forward.3} parent=51 // pred_fallthru
          _
      $region52: #{fbank_aug_forward.3} parent=5 // pred_fallthru
        _
    $region6: #{fbank_aug_forward.3} parent=1 // loop_footer
      %s25 = sadd.s32 1, %s21
    $region7: #{fbank_aug_forward.3} parent=1 // loop_footer_branch
      %20 = sbr.rel target = $region3
    $region8: #{fbank_aug_forward.3} parent=1 // loop_exit
      _
    %1803 = vsyncpa [#allocation5], 1
    %s1804 = scalar_lea.sflag [#allocation5], 1
    %1805 = vsyncpa %s1804, 1
    %1806 = vsyncpa [#allocation8], 1
    %1807 = vsyncpa [#allocation6], 1
    %s1808 = scalar_lea.sflag [#allocation6], 1
    %1809 = vsyncpa %s1808, 1

</llo_original>
